<compile_context>
chip_gen: v5e
topology: v5e:2x2
jax: 0.10.0
libtpu: 0.0.40
codegen_flags: <defaults>
</compile_context>

<pallas_src>
import math

import jax
import jax.numpy as jnp
from jax import lax
from jax.experimental import pallas as pl
from jax.experimental.pallas import tpu as pltpu

# ---------------- config (small synthetic) ----------------
VOCAB = 64
N_EMBD = 32
N_HEAD = 4
HEAD_DIM = N_EMBD // N_HEAD
N_INNER = 4 * N_EMBD          # 128
N_LAYER = 2
N_POS = 16
LN_EPS = 1e-5                 # PyTorch nn.LayerNorm default
V_PAD = 128                   # lane-dense LM-head width (multiple of 128, >= VOCAB)
LANES = 128

assert VOCAB % 8 == 0 and N_EMBD % 8 == 0 and N_INNER % 8 == 0

# ---------------- packed-slab layouts ----------------
# small-param slab: one 128-lane row per vector
SP_ROWS_PER_LAYER = 8         # ln1_w, ln1_b, b_qkv, bo, ln2_w, ln2_b, bfc, bproj
LNF_SP_ROW = N_LAYER * SP_ROWS_PER_LAYER          # rows for lnf_w / lnf_b
SP_ROWS = ((LNF_SP_ROW + 2 + 7) // 8) * 8          # pad to sublane multiple

# weight slab: matrices stacked along rows, all padded to 128 lanes
TOK_W_ROW = 0                                      # tok_emb (VOCAB, N_EMBD)
HEAD_W_ROW = TOK_W_ROW + VOCAB                     # LM head (N_EMBD, V_PAD)
LAYER_W_ROW0 = HEAD_W_ROW + N_EMBD
W_ROWS_PER_LAYER = 3 * N_EMBD + N_INNER            # w_qkv(32)+wo(32)+wfc(32)+wproj(128)
QKV_OFF, WO_OFF, WFC_OFF, WPROJ_OFF = 0, N_EMBD, 2 * N_EMBD, 3 * N_EMBD
W_ROWS = LAYER_W_ROW0 + N_LAYER * W_ROWS_PER_LAYER


# ---------------- in-kernel helpers ----------------
def _layernorm(x, w, b):
    # x: (T, E), w/b: (1, E); biased variance like PyTorch nn.LayerNorm
    mu = jnp.mean(x, axis=-1, keepdims=True)
    var = jnp.mean((x - mu) ** 2, axis=-1, keepdims=True)
    return (x - mu) * lax.rsqrt(var + LN_EPS) * w + b


def _gelu_exact(x):
    # PyTorch nn.GELU() default: exact erf-based GELU
    return 0.5 * x * (1.0 + lax.erf(x * (1.0 / math.sqrt(2.0))))


# ---------------- fully fused GPT forward kernel (one sequence per grid step) ----------------
def gpt_kernel(ids_ref, pe_ref, sp_ref, w_ref, out_ref):
    T = ids_ref.shape[0]                          # static per compile

    # ---- embedding gather via one-hot matmul (exact) + positional encoding ----
    ids = ids_ref[...]                            # (T, 1) int32
    vocab_iota = lax.broadcasted_iota(jnp.int32, (T, VOCAB), 1)
    onehot = jnp.where(ids == vocab_iota, 1.0, 0.0).astype(jnp.float32)
    tok_emb = w_ref[TOK_W_ROW:TOK_W_ROW + VOCAB, 0:N_EMBD]
    x = jnp.dot(onehot, tok_emb, preferred_element_type=jnp.float32) + pe_ref[...]

    # ---- additive causal bias (scale is folded into Q weights at pack time) ----
    r = lax.broadcasted_iota(jnp.int32, (T, T), 0)
    c = lax.broadcasted_iota(jnp.int32, (T, T), 1)
    bias = jnp.where(c <= r, 0.0, -1e30).astype(jnp.float32)

    # ---- transformer blocks (trace-time unrolled, all weights resident in VMEM) ----
    for l in range(N_LAYER):
        sp_l = sp_ref[l * SP_ROWS_PER_LAYER:(l + 1) * SP_ROWS_PER_LAYER, :]   # (8, 128)
        ln1_w = sp_l[0:1, 0:N_EMBD]
        ln1_b = sp_l[1:2, 0:N_EMBD]
        b_qkv = sp_l[2:3, 0:3 * N_EMBD]
        bo    = sp_l[3:4, 0:N_EMBD]
        ln2_w = sp_l[4:5, 0:N_EMBD]
        ln2_b = sp_l[5:6, 0:N_EMBD]
        bfc   = sp_l[6:7, 0:N_INNER]
        bproj = sp_l[7:8, 0:N_EMBD]

        wb = LAYER_W_ROW0 + l * W_ROWS_PER_LAYER
        w_qkv = w_ref[wb + QKV_OFF:wb + QKV_OFF + N_EMBD, 0:3 * N_EMBD]
        wo    = w_ref[wb + WO_OFF:wb + WO_OFF + N_EMBD, 0:N_EMBD]
        wfc   = w_ref[wb + WFC_OFF:wb + WFC_OFF + N_EMBD, 0:N_INNER]
        wproj = w_ref[wb + WPROJ_OFF:wb + WPROJ_OFF + N_INNER, 0:N_EMBD]

        # -- ln1 + fused-QKV causal multi-head self-attention --
        h = _layernorm(x, ln1_w, ln1_b)
        qkv = jnp.dot(h, w_qkv, preferred_element_type=jnp.float32) + b_qkv   # (T, 3E)

        # per-head scores, then ONE batched softmax chain over the stacked (H, T, T)
        scores = []
        for hh in range(N_HEAD):
            lo = hh * HEAD_DIM
            qh = qkv[:, lo:lo + HEAD_DIM]
            kh = qkv[:, N_EMBD + lo:N_EMBD + lo + HEAD_DIM]
            scores.append(lax.dot_general(qh, kh, (((1,), (1,)), ((), ())),
                                          preferred_element_type=jnp.float32))
        s = jnp.stack(scores, axis=0) + bias[None]          # (H, T, T)
        s = s - jnp.max(s, axis=-1, keepdims=True)
        p = jnp.exp(s)
        p = p * pl.reciprocal(jnp.sum(p, axis=-1, keepdims=True), approx=True)

        # head-output combination: Sum_h (p_h @ v_h) @ wo_h  (no lane concat;
        # accumulation form maps to MRB in-place accumulate on v7x)
        attn = None
        for hh in range(N_HEAD):
            lo = hh * HEAD_DIM
            vh = qkv[:, 2 * N_EMBD + lo:2 * N_EMBD + lo + HEAD_DIM]
            oh = jnp.dot(p[hh], vh, preferred_element_type=jnp.float32)       # (T, D)
            contrib = jnp.dot(oh, wo[lo:lo + HEAD_DIM, :],
                              preferred_element_type=jnp.float32)             # (T, E)
            attn = contrib if attn is None else attn + contrib
        x = x + attn + bo                         # residual 1 (resid dropout = identity)

        # -- ln2 + MLP --
        h2 = _layernorm(x, ln2_w, ln2_b)
        ff = jnp.dot(h2, wfc, preferred_element_type=jnp.float32) + bfc
        ff = _gelu_exact(ff)
        ff = jnp.dot(ff, wproj, preferred_element_type=jnp.float32) + bproj
        x = x + ff                                # residual 2

    # ---- final layernorm + LM head (128-lane padded -> unmasked full-lane store) ----
    sp_f = sp_ref[LNF_SP_ROW:LNF_SP_ROW + 8, :]
    hf = _layernorm(x, sp_f[0:1, 0:N_EMBD], sp_f[1:2, 0:N_EMBD])
    head_w = w_ref[HEAD_W_ROW:HEAD_W_ROW + N_EMBD, 0:V_PAD]
    out_ref[...] = jnp.dot(hf, head_w, preferred_element_type=jnp.float32)


# ---------------- wrapper ----------------
def gpt_forward(input_ids, small_slab, weight_slab, pe):
    B, T = input_ids.shape
    ids2d = input_ids.reshape(B * T, 1).astype(jnp.int32)
    pe_t = pe[0, :T, :]                           # (T, E), shared by all sequences

    logits_pad = pl.pallas_call(
        gpt_kernel,
        out_shape=jax.ShapeDtypeStruct((B * T, V_PAD), jnp.float32),
        grid=(B,),
        in_specs=[
            pl.BlockSpec((T, 1), lambda b: (b, 0)),            # ids for this sequence
            pl.BlockSpec((T, N_EMBD), lambda b: (0, 0)),        # PE slice, VMEM-resident
            pl.BlockSpec((SP_ROWS, LANES), lambda b: (0, 0)),   # small-param slab, resident
            pl.BlockSpec((W_ROWS, LANES), lambda b: (0, 0)),    # weight slab, resident
        ],
        out_specs=pl.BlockSpec((T, V_PAD), lambda b: (b, 0)),
        compiler_params=pltpu.CompilerParams(
            dimension_semantics=("parallel",)),                 # both v7x TCs when B > 1
    )(ids2d, pe_t, small_slab, weight_slab)

    return logits_pad[:, :VOCAB].reshape(B, T, VOCAB)


# ---------------- parameter init (deterministic, synthetic) ----------------
def _normal(key, shape):
    return 0.02 * jax.random.normal(key, shape, jnp.float32)


def init_params(key):
    keys = jax.random.split(key, 2 + N_LAYER)
    params = {
        "tok_emb": _normal(keys[0], (VOCAB, N_EMBD)),
        "head_w": _normal(keys[1], (N_EMBD, VOCAB)),      # head.weight.T (bias=False)
        "lnf_w": jnp.ones((1, N_EMBD), jnp.float32),
        "lnf_b": jnp.zeros((1, N_EMBD), jnp.float32),
        "blocks": [],
    }
    for l in range(N_LAYER):
        k = jax.random.split(keys[2 + l], 6)
        wq = _normal(k[0], (N_EMBD, N_EMBD))
        wk = _normal(k[1], (N_EMBD, N_EMBD))
        wv = _normal(k[2], (N_EMBD, N_EMBD))
        params["blocks"].append({
            "ln1_w": jnp.ones((1, N_EMBD), jnp.float32),
            "ln1_b": jnp.zeros((1, N_EMBD), jnp.float32),
            "w_qkv": jnp.concatenate([wq, wk, wv], axis=1),           # fused (E, 3E)
            "b_qkv": jnp.zeros((1, 3 * N_EMBD), jnp.float32),
            "wo": _normal(k[3], (N_EMBD, N_EMBD)),
            "bo": jnp.zeros((1, N_EMBD), jnp.float32),
            "ln2_w": jnp.ones((1, N_EMBD), jnp.float32),
            "ln2_b": jnp.zeros((1, N_EMBD), jnp.float32),
            "wfc": _normal(k[4], (N_EMBD, N_INNER)),
            "bfc": jnp.zeros((1, N_INNER), jnp.float32),
            "wproj": _normal(k[5], (N_INNER, N_EMBD)),
            "bproj": jnp.zeros((1, N_EMBD), jnp.float32),
        })
    return params


def pack_params(params):
    """Pack all parameters into two lane-dense f32 slabs (one DMA each)."""
    scale = 1.0 / math.sqrt(HEAD_DIM)

    sp = jnp.zeros((SP_ROWS, LANES), jnp.float32)

    def put(slab, row, vec):
        vec = jnp.asarray(vec).reshape(-1)
        return slab.at[row, :vec.shape[0]].set(vec)

    for l, blk in enumerate(params["blocks"]):
        base = l * SP_ROWS_PER_LAYER
        b_qkv = blk["b_qkv"].reshape(-1).at[:N_EMBD].multiply(scale)   # fold 1/sqrt(dh) into Q
        sp = put(sp, base + 0, blk["ln1_w"])
        sp = put(sp, base + 1, blk["ln1_b"])
        sp = put(sp, base + 2, b_qkv)
        sp = put(sp, base + 3, blk["bo"])
        sp = put(sp, base + 4, blk["ln2_w"])
        sp = put(sp, base + 5, blk["ln2_b"])
        sp = put(sp, base + 6, blk["bfc"])
        sp = put(sp, base + 7, blk["bproj"])
    sp = put(sp, LNF_SP_ROW + 0, params["lnf_w"])
    sp = put(sp, LNF_SP_ROW + 1, params["lnf_b"])

    w = jnp.zeros((W_ROWS, LANES), jnp.float32)
    w = w.at[TOK_W_ROW:TOK_W_ROW + VOCAB, 0:N_EMBD].set(params["tok_emb"])
    w = w.at[HEAD_W_ROW:HEAD_W_ROW + N_EMBD, 0:VOCAB].set(params["head_w"])
    for l, blk in enumerate(params["blocks"]):
        base = LAYER_W_ROW0 + l * W_ROWS_PER_LAYER
        w_qkv = blk["w_qkv"].at[:, :N_EMBD].multiply(scale)            # fold 1/sqrt(dh) into Q
        w = w.at[base + QKV_OFF:base + QKV_OFF + N_EMBD, 0:3 * N_EMBD].set(w_qkv)
        w = w.at[base + WO_OFF:base + WO_OFF + N_EMBD, 0:N_EMBD].set(blk["wo"])
        w = w.at[base + WFC_OFF:base + WFC_OFF + N_EMBD, 0:N_INNER].set(blk["wfc"])
        w = w.at[base + WPROJ_OFF:base + WPROJ_OFF + N_INNER, 0:N_EMBD].set(blk["wproj"])
    return sp, w


def sinusoidal_pe(max_len, d_model):
    position = jnp.arange(max_len, dtype=jnp.float32)[:, None]
    div_term = jnp.exp(jnp.arange(0, d_model, 2, dtype=jnp.float32)
                       * (-math.log(10000.0) / d_model))
    pe = jnp.zeros((max_len, d_model), jnp.float32)
    pe = pe.at[:, 0::2].set(jnp.sin(position * div_term))
    pe = pe.at[:, 1::2].set(jnp.cos(position * div_term))
    return pe[None]                                # (1, max_len, d_model)


# ---------------- pure-JAX reference (parity check) ----------------
def gpt_reference(input_ids, params, pe):
    B, T = input_ids.shape
    x = params["tok_emb"][input_ids] + pe[0, :T, :][None]
    causal = jnp.tril(jnp.ones((T, T), dtype=bool))
    scale = 1.0 / math.sqrt(HEAD_DIM)

    def ln(v, w, b):
        mu = v.mean(-1, keepdims=True)
        var = ((v - mu) ** 2).mean(-1, keepdims=True)
        return (v - mu) / jnp.sqrt(var + LN_EPS) * w + b

    for blk in params["blocks"]:
        h = ln(x, blk["ln1_w"], blk["ln1_b"])
        qkv = h @ blk["w_qkv"] + blk["b_qkv"]
        q, k, v = jnp.split(qkv, 3, axis=-1)
        sh = lambda t: t.reshape(B, T, N_HEAD, HEAD_DIM).transpose(0, 2, 1, 3)
        q, k, v = sh(q), sh(k), sh(v)
        s = (q @ k.transpose(0, 1, 3, 2)) * scale
        s = jnp.where(causal, s, -jnp.inf)
        p = jax.nn.softmax(s, axis=-1)
        o = (p @ v).transpose(0, 2, 1, 3).reshape(B, T, N_EMBD)
        x = x + o @ blk["wo"] + blk["bo"]
        h2 = ln(x, blk["ln2_w"], blk["ln2_b"])
        ff = h2 @ blk["wfc"] + blk["bfc"]
        ff = 0.5 * ff * (1.0 + lax.erf(ff / math.sqrt(2.0)))
        x = x + ff @ blk["wproj"] + blk["bproj"]
    x = ln(x, params["lnf_w"], params["lnf_b"])
    return x @ params["head_w"]


if __name__ == "__main__":
    key = jax.random.PRNGKey(0)
    k_params, k_ids = jax.random.split(key)

    B, T = 2, 8
    params = init_params(k_params)
    small_slab, weight_slab = pack_params(params)
    pe = sinusoidal_pe(N_POS, N_EMBD)
    input_ids = jax.random.randint(k_ids, (B, T), 0, VOCAB, dtype=jnp.int32)

    forward = jax.jit(gpt_forward)
    logits = jax.block_until_ready(forward(input_ids, small_slab, weight_slab, pe))

    assert logits.shape == (B, T, VOCAB), logits.shape
    assert bool(jnp.all(jnp.isfinite(logits)))

    # parity vs pure-JAX reference (approx reciprocal in softmax -> small tolerance)
    ref = gpt_reference(input_ids, params, pe)
    max_err = float(jnp.max(jnp.abs(logits - ref)))
    assert max_err < 5e-3, f"parity error too large: {max_err}"

    print("KERNEL_OK")
</pallas_src>

<mosaic_0001>
module attributes {stable_mosaic.version = 11 : i64} {
  func.func @gpt_kernel(%arg0: i32, %arg1: memref<8x1xi32, #tpu.memory_space<vmem>>, %arg2: memref<8x32xf32, #tpu.memory_space<vmem>>, %arg3: memref<24x128xf32, #tpu.memory_space<vmem>>, %arg4: memref<544x128xf32, #tpu.memory_space<vmem>>, %arg5: memref<8x128xf32, #tpu.memory_space<vmem>>) attributes {dimension_semantics = [#tpu.dimension_semantics<parallel>], iteration_bounds = array<i64: 2>, scalar_prefetch = 0 : i64, scratch_operands = 0 : i64, tpu.core_type = #tpu.core_type<tc>, window_params = [{transform_indices = @transform_0, window_bounds = array<i64: 8, 1>}, {pipeline_mode = #tpu.pipeline_mode<synchronous>, transform_indices = @transform_1, window_bounds = array<i64: 8, 32>}, {pipeline_mode = #tpu.pipeline_mode<synchronous>, transform_indices = @transform_2, window_bounds = array<i64: 24, 128>}, {pipeline_mode = #tpu.pipeline_mode<synchronous>, transform_indices = @transform_3, window_bounds = array<i64: 544, 128>}, {transform_indices = @transform_4, window_bounds = array<i64: 8, 128>}]} {
    %c0 = arith.constant 0 : index
    %c0_0 = arith.constant 0 : index
    %0 = vector.load %arg1[%c0, %c0_0] : memref<8x1xi32, #tpu.memory_space<vmem>>, vector<8x1xi32>
    %1 = tpu.iota {dimensions = array<i32: 1>} : vector<8x64xi32>
    %2 = vector.broadcast %0 : vector<8x1xi32> to vector<8x64xi32>
    %3 = arith.cmpi eq, %2, %1 : vector<8x64xi32>
    %cst = arith.constant 1.000000e+00 : f32
    %cst_1 = arith.constant 0.000000e+00 : f32
    %4 = vector.broadcast %cst : f32 to vector<8x64xf32>
    %5 = vector.broadcast %cst_1 : f32 to vector<8x64xf32>
    %6 = arith.select %3, %4, %5 : vector<8x64xi1>, vector<8x64xf32>
    %c0_2 = arith.constant 0 : index
    %c0_3 = arith.constant 0 : index
    %7 = vector.load %arg4[%c0_2, %c0_3] : memref<544x128xf32, #tpu.memory_space<vmem>>, vector<64x32xf32>
    %cst_4 = arith.constant dense<0.000000e+00> : vector<8x32xf32>
    %8 = tpu.matmul %6, %7, %cst_4 {dimension_numbers = #tpu.dot_dimension_numbers<[1], [0], [0], [1], [0, 0, 1, 1], [], []>} : vector<8x64xf32>, vector<64x32xf32>, vector<8x32xf32> -> vector<8x32xf32>
    %c0_5 = arith.constant 0 : index
    %c0_6 = arith.constant 0 : index
    %9 = vector.load %arg2[%c0_5, %c0_6] : memref<8x32xf32, #tpu.memory_space<vmem>>, vector<8x32xf32>
    %10 = arith.addf %8, %9 : vector<8x32xf32>
    %11 = tpu.iota {dimensions = array<i32: 0>} : vector<8x8xi32>
    %12 = tpu.iota {dimensions = array<i32: 1>} : vector<8x8xi32>
    %13 = arith.cmpi sle, %12, %11 : vector<8x8xi32>
    %cst_7 = arith.constant 0.000000e+00 : f32
    %cst_8 = arith.constant -1.000000e+30 : f32
    %14 = vector.broadcast %cst_7 : f32 to vector<8x8xf32>
    %15 = vector.broadcast %cst_8 : f32 to vector<8x8xf32>
    %16 = arith.select %13, %14, %15 : vector<8x8xi1>, vector<8x8xf32>
    %c0_9 = arith.constant 0 : index
    %c0_10 = arith.constant 0 : index
    %17 = vector.load %arg3[%c0_9, %c0_10] : memref<24x128xf32, #tpu.memory_space<vmem>>, vector<8x128xf32>
    %18 = vector.extract_strided_slice %17 {offsets = [0, 0], sizes = [1, 32], strides = [1, 1]} : vector<8x128xf32> to vector<1x32xf32>
    %19 = vector.extract_strided_slice %17 {offsets = [1, 0], sizes = [1, 32], strides = [1, 1]} : vector<8x128xf32> to vector<1x32xf32>
    %20 = vector.extract_strided_slice %17 {offsets = [2, 0], sizes = [1, 96], strides = [1, 1]} : vector<8x128xf32> to vector<1x96xf32>
    %21 = vector.extract_strided_slice %17 {offsets = [3, 0], sizes = [1, 32], strides = [1, 1]} : vector<8x128xf32> to vector<1x32xf32>
    %22 = vector.extract_strided_slice %17 {offsets = [4, 0], sizes = [1, 32], strides = [1, 1]} : vector<8x128xf32> to vector<1x32xf32>
    %23 = vector.extract_strided_slice %17 {offsets = [5, 0], sizes = [1, 32], strides = [1, 1]} : vector<8x128xf32> to vector<1x32xf32>
    %24 = vector.extract_strided_slice %17 {offsets = [6, 0], sizes = [1, 128], strides = [1, 1]} : vector<8x128xf32> to vector<1x128xf32>
    %25 = vector.extract_strided_slice %17 {offsets = [7, 0], sizes = [1, 32], strides = [1, 1]} : vector<8x128xf32> to vector<1x32xf32>
    %c96 = arith.constant 96 : index
    %c0_11 = arith.constant 0 : index
    %26 = vector.load %arg4[%c96, %c0_11] : memref<544x128xf32, #tpu.memory_space<vmem>>, vector<32x96xf32>
    %c128 = arith.constant 128 : index
    %c0_12 = arith.constant 0 : index
    %27 = vector.load %arg4[%c128, %c0_12] : memref<544x128xf32, #tpu.memory_space<vmem>>, vector<32x32xf32>
    %c160 = arith.constant 160 : index
    %c0_13 = arith.constant 0 : index
    %28 = vector.load %arg4[%c160, %c0_13] : memref<544x128xf32, #tpu.memory_space<vmem>>, vector<32x128xf32>
    %c192 = arith.constant 192 : index
    %c0_14 = arith.constant 0 : index
    %29 = vector.load %arg4[%c192, %c0_14] : memref<544x128xf32, #tpu.memory_space<vmem>>, vector<128x32xf32>
    %cst_15 = arith.constant dense<0.000000e+00> : vector<8xf32>
    %30 = vector.multi_reduction <add>, %10, %cst_15 [1] : vector<8x32xf32> to vector<8xf32>
    %31 = vector.shape_cast %30 : vector<8xf32> to vector<8x1xf32>
    %cst_16 = arith.constant 3.200000e+01 : f32
    %32 = vector.broadcast %cst_16 : f32 to vector<8x1xf32>
    %33 = arith.divf %31, %32 : vector<8x1xf32>
    %34 = vector.broadcast %33 : vector<8x1xf32> to vector<8x32xf32>
    %35 = arith.subf %10, %34 : vector<8x32xf32>
    %36 = arith.mulf %35, %35 : vector<8x32xf32>
    %cst_17 = arith.constant dense<0.000000e+00> : vector<8xf32>
    %37 = vector.multi_reduction <add>, %36, %cst_17 [1] : vector<8x32xf32> to vector<8xf32>
    %38 = vector.shape_cast %37 : vector<8xf32> to vector<8x1xf32>
    %cst_18 = arith.constant 3.200000e+01 : f32
    %39 = vector.broadcast %cst_18 : f32 to vector<8x1xf32>
    %40 = arith.divf %38, %39 : vector<8x1xf32>
    %41 = vector.broadcast %33 : vector<8x1xf32> to vector<8x32xf32>
    %42 = arith.subf %10, %41 : vector<8x32xf32>
    %cst_19 = arith.constant 9.99999974E-6 : f32
    %43 = vector.broadcast %cst_19 : f32 to vector<8x1xf32>
    %44 = arith.addf %40, %43 : vector<8x1xf32>
    %45 = math.rsqrt %44 : vector<8x1xf32>
    %46 = vector.broadcast %45 : vector<8x1xf32> to vector<8x32xf32>
    %47 = arith.mulf %42, %46 : vector<8x32xf32>
    %48 = vector.broadcast %18 : vector<1x32xf32> to vector<8x32xf32>
    %49 = arith.mulf %47, %48 : vector<8x32xf32>
    %50 = vector.broadcast %19 : vector<1x32xf32> to vector<8x32xf32>
    %51 = arith.addf %49, %50 : vector<8x32xf32>
    %cst_20 = arith.constant dense<0.000000e+00> : vector<8x96xf32>
    %52 = tpu.matmul %51, %26, %cst_20 {dimension_numbers = #tpu.dot_dimension_numbers<[1], [0], [0], [1], [0, 0, 1, 1], [], []>} : vector<8x32xf32>, vector<32x96xf32>, vector<8x96xf32> -> vector<8x96xf32>
    %53 = vector.broadcast %20 : vector<1x96xf32> to vector<8x96xf32>
    %54 = arith.addf %52, %53 : vector<8x96xf32>
    %55 = vector.extract_strided_slice %54 {offsets = [0, 0], sizes = [8, 8], strides = [1, 1]} : vector<8x96xf32> to vector<8x8xf32>
    %56 = vector.extract_strided_slice %54 {offsets = [0, 32], sizes = [8, 8], strides = [1, 1]} : vector<8x96xf32> to vector<8x8xf32>
    %cst_21 = arith.constant dense<0.000000e+00> : vector<8x8xf32>
    %57 = tpu.matmul %55, %56, %cst_21 {dimension_numbers = #tpu.dot_dimension_numbers<[1], [1], [0], [0], [0, 0, 1, 0], [], []>} : vector<8x8xf32>, vector<8x8xf32>, vector<8x8xf32> -> vector<8x8xf32>
    %58 = vector.extract_strided_slice %54 {offsets = [0, 8], sizes = [8, 8], strides = [1, 1]} : vector<8x96xf32> to vector<8x8xf32>
    %59 = vector.extract_strided_slice %54 {offsets = [0, 40], sizes = [8, 8], strides = [1, 1]} : vector<8x96xf32> to vector<8x8xf32>
    %cst_22 = arith.constant dense<0.000000e+00> : vector<8x8xf32>
    %60 = tpu.matmul %58, %59, %cst_22 {dimension_numbers = #tpu.dot_dimension_numbers<[1], [1], [0], [0], [0, 0, 1, 0], [], []>} : vector<8x8xf32>, vector<8x8xf32>, vector<8x8xf32> -> vector<8x8xf32>
    %61 = vector.extract_strided_slice %54 {offsets = [0, 16], sizes = [8, 8], strides = [1, 1]} : vector<8x96xf32> to vector<8x8xf32>
    %62 = vector.extract_strided_slice %54 {offsets = [0, 48], sizes = [8, 8], strides = [1, 1]} : vector<8x96xf32> to vector<8x8xf32>
    %cst_23 = arith.constant dense<0.000000e+00> : vector<8x8xf32>
    %63 = tpu.matmul %61, %62, %cst_23 {dimension_numbers = #tpu.dot_dimension_numbers<[1], [1], [0], [0], [0, 0, 1, 0], [], []>} : vector<8x8xf32>, vector<8x8xf32>, vector<8x8xf32> -> vector<8x8xf32>
    %64 = vector.extract_strided_slice %54 {offsets = [0, 24], sizes = [8, 8], strides = [1, 1]} : vector<8x96xf32> to vector<8x8xf32>
    %65 = vector.extract_strided_slice %54 {offsets = [0, 56], sizes = [8, 8], strides = [1, 1]} : vector<8x96xf32> to vector<8x8xf32>
    %cst_24 = arith.constant dense<0.000000e+00> : vector<8x8xf32>
    %66 = tpu.matmul %64, %65, %cst_24 {dimension_numbers = #tpu.dot_dimension_numbers<[1], [1], [0], [0], [0, 0, 1, 0], [], []>} : vector<8x8xf32>, vector<8x8xf32>, vector<8x8xf32> -> vector<8x8xf32>
    %67 = vector.shape_cast %57 : vector<8x8xf32> to vector<1x8x8xf32>
    %68 = vector.shape_cast %60 : vector<8x8xf32> to vector<1x8x8xf32>
    %69 = vector.shape_cast %63 : vector<8x8xf32> to vector<1x8x8xf32>
    %70 = vector.shape_cast %66 : vector<8x8xf32> to vector<1x8x8xf32>
    %71 = tpu.concatenate %67, %68, %69, %70 in 0 : vector<1x8x8xf32>, vector<1x8x8xf32>, vector<1x8x8xf32>, vector<1x8x8xf32> -> vector<4x8x8xf32>
    %72 = vector.shape_cast %16 : vector<8x8xf32> to vector<1x8x8xf32>
    %73 = vector.broadcast %72 : vector<1x8x8xf32> to vector<4x8x8xf32>
    %74 = arith.addf %71, %73 : vector<4x8x8xf32>
    %cst_25 = arith.constant dense<0xFF800000> : vector<4x8xf32>
    %75 = vector.multi_reduction <maximumf>, %74, %cst_25 [2] : vector<4x8x8xf32> to vector<4x8xf32>
    %76 = vector.shape_cast %75 : vector<4x8xf32> to vector<4x8x1xf32>
    %77 = vector.broadcast %76 : vector<4x8x1xf32> to vector<4x8x8xf32>
    %78 = arith.subf %74, %77 : vector<4x8x8xf32>
    %79 = math.exp %78 : vector<4x8x8xf32>
    %cst_26 = arith.constant dense<0.000000e+00> : vector<4x8xf32>
    %80 = vector.multi_reduction <add>, %79, %cst_26 [2] : vector<4x8x8xf32> to vector<4x8xf32>
    %81 = vector.shape_cast %80 : vector<4x8xf32> to vector<4x8x1xf32>
    %82 = tpu.reciprocal %81 {approx = true} : vector<4x8x1xf32> -> vector<4x8x1xf32>
    %83 = vector.broadcast %82 : vector<4x8x1xf32> to vector<4x8x8xf32>
    %84 = arith.mulf %79, %83 : vector<4x8x8xf32>
    %85 = vector.extract_strided_slice %54 {offsets = [0, 64], sizes = [8, 8], strides = [1, 1]} : vector<8x96xf32> to vector<8x8xf32>
    %86 = vector.extract_strided_slice %84 {offsets = [0, 0, 0], sizes = [1, 8, 8], strides = [1, 1, 1]} : vector<4x8x8xf32> to vector<1x8x8xf32>
    %87 = vector.shape_cast %86 : vector<1x8x8xf32> to vector<8x8xf32>
    %cst_27 = arith.constant dense<0.000000e+00> : vector<8x8xf32>
    %88 = tpu.matmul %87, %85, %cst_27 {dimension_numbers = #tpu.dot_dimension_numbers<[1], [0], [0], [1], [0, 0, 1, 1], [], []>} : vector<8x8xf32>, vector<8x8xf32>, vector<8x8xf32> -> vector<8x8xf32>
    %89 = vector.extract_strided_slice %27 {offsets = [0, 0], sizes = [8, 32], strides = [1, 1]} : vector<32x32xf32> to vector<8x32xf32>
    %cst_28 = arith.constant dense<0.000000e+00> : vector<8x32xf32>
    %90 = tpu.matmul %88, %89, %cst_28 {dimension_numbers = #tpu.dot_dimension_numbers<[1], [0], [0], [1], [0, 0, 1, 1], [], []>} : vector<8x8xf32>, vector<8x32xf32>, vector<8x32xf32> -> vector<8x32xf32>
    %91 = vector.extract_strided_slice %54 {offsets = [0, 72], sizes = [8, 8], strides = [1, 1]} : vector<8x96xf32> to vector<8x8xf32>
    %92 = vector.extract_strided_slice %84 {offsets = [1, 0, 0], sizes = [1, 8, 8], strides = [1, 1, 1]} : vector<4x8x8xf32> to vector<1x8x8xf32>
    %93 = vector.shape_cast %92 : vector<1x8x8xf32> to vector<8x8xf32>
    %cst_29 = arith.constant dense<0.000000e+00> : vector<8x8xf32>
    %94 = tpu.matmul %93, %91, %cst_29 {dimension_numbers = #tpu.dot_dimension_numbers<[1], [0], [0], [1], [0, 0, 1, 1], [], []>} : vector<8x8xf32>, vector<8x8xf32>, vector<8x8xf32> -> vector<8x8xf32>
    %95 = vector.extract_strided_slice %27 {offsets = [8, 0], sizes = [8, 32], strides = [1, 1]} : vector<32x32xf32> to vector<8x32xf32>
    %cst_30 = arith.constant dense<0.000000e+00> : vector<8x32xf32>
    %96 = tpu.matmul %94, %95, %cst_30 {dimension_numbers = #tpu.dot_dimension_numbers<[1], [0], [0], [1], [0, 0, 1, 1], [], []>} : vector<8x8xf32>, vector<8x32xf32>, vector<8x32xf32> -> vector<8x32xf32>
    %97 = arith.addf %90, %96 : vector<8x32xf32>
    %98 = vector.extract_strided_slice %54 {offsets = [0, 80], sizes = [8, 8], strides = [1, 1]} : vector<8x96xf32> to vector<8x8xf32>
    %99 = vector.extract_strided_slice %84 {offsets = [2, 0, 0], sizes = [1, 8, 8], strides = [1, 1, 1]} : vector<4x8x8xf32> to vector<1x8x8xf32>
    %100 = vector.shape_cast %99 : vector<1x8x8xf32> to vector<8x8xf32>
    %cst_31 = arith.constant dense<0.000000e+00> : vector<8x8xf32>
    %101 = tpu.matmul %100, %98, %cst_31 {dimension_numbers = #tpu.dot_dimension_numbers<[1], [0], [0], [1], [0, 0, 1, 1], [], []>} : vector<8x8xf32>, vector<8x8xf32>, vector<8x8xf32> -> vector<8x8xf32>
    %102 = vector.extract_strided_slice %27 {offsets = [16, 0], sizes = [8, 32], strides = [1, 1]} : vector<32x32xf32> to vector<8x32xf32>
    %cst_32 = arith.constant dense<0.000000e+00> : vector<8x32xf32>
    %103 = tpu.matmul %101, %102, %cst_32 {dimension_numbers = #tpu.dot_dimension_numbers<[1], [0], [0], [1], [0, 0, 1, 1], [], []>} : vector<8x8xf32>, vector<8x32xf32>, vector<8x32xf32> -> vector<8x32xf32>
    %104 = arith.addf %97, %103 : vector<8x32xf32>
    %105 = vector.extract_strided_slice %54 {offsets = [0, 88], sizes = [8, 8], strides = [1, 1]} : vector<8x96xf32> to vector<8x8xf32>
    %106 = vector.extract_strided_slice %84 {offsets = [3, 0, 0], sizes = [1, 8, 8], strides = [1, 1, 1]} : vector<4x8x8xf32> to vector<1x8x8xf32>
    %107 = vector.shape_cast %106 : vector<1x8x8xf32> to vector<8x8xf32>
    %cst_33 = arith.constant dense<0.000000e+00> : vector<8x8xf32>
    %108 = tpu.matmul %107, %105, %cst_33 {dimension_numbers = #tpu.dot_dimension_numbers<[1], [0], [0], [1], [0, 0, 1, 1], [], []>} : vector<8x8xf32>, vector<8x8xf32>, vector<8x8xf32> -> vector<8x8xf32>
    %109 = vector.extract_strided_slice %27 {offsets = [24, 0], sizes = [8, 32], strides = [1, 1]} : vector<32x32xf32> to vector<8x32xf32>
    %cst_34 = arith.constant dense<0.000000e+00> : vector<8x32xf32>
    %110 = tpu.matmul %108, %109, %cst_34 {dimension_numbers = #tpu.dot_dimension_numbers<[1], [0], [0], [1], [0, 0, 1, 1], [], []>} : vector<8x8xf32>, vector<8x32xf32>, vector<8x32xf32> -> vector<8x32xf32>
    %111 = arith.addf %104, %110 : vector<8x32xf32>
    %112 = arith.addf %10, %111 : vector<8x32xf32>
    %113 = vector.broadcast %21 : vector<1x32xf32> to vector<8x32xf32>
    %114 = arith.addf %112, %113 : vector<8x32xf32>
    %cst_35 = arith.constant dense<0.000000e+00> : vector<8xf32>
    %115 = vector.multi_reduction <add>, %114, %cst_35 [1] : vector<8x32xf32> to vector<8xf32>
    %116 = vector.shape_cast %115 : vector<8xf32> to vector<8x1xf32>
    %cst_36 = arith.constant 3.200000e+01 : f32
    %117 = vector.broadcast %cst_36 : f32 to vector<8x1xf32>
    %118 = arith.divf %116, %117 : vector<8x1xf32>
    %119 = vector.broadcast %118 : vector<8x1xf32> to vector<8x32xf32>
    %120 = arith.subf %114, %119 : vector<8x32xf32>
    %121 = arith.mulf %120, %120 : vector<8x32xf32>
    %cst_37 = arith.constant dense<0.000000e+00> : vector<8xf32>
    %122 = vector.multi_reduction <add>, %121, %cst_37 [1] : vector<8x32xf32> to vector<8xf32>
    %123 = vector.shape_cast %122 : vector<8xf32> to vector<8x1xf32>
    %cst_38 = arith.constant 3.200000e+01 : f32
    %124 = vector.broadcast %cst_38 : f32 to vector<8x1xf32>
    %125 = arith.divf %123, %124 : vector<8x1xf32>
    %126 = vector.broadcast %118 : vector<8x1xf32> to vector<8x32xf32>
    %127 = arith.subf %114, %126 : vector<8x32xf32>
    %cst_39 = arith.constant 9.99999974E-6 : f32
    %128 = vector.broadcast %cst_39 : f32 to vector<8x1xf32>
    %129 = arith.addf %125, %128 : vector<8x1xf32>
    %130 = math.rsqrt %129 : vector<8x1xf32>
    %131 = vector.broadcast %130 : vector<8x1xf32> to vector<8x32xf32>
    %132 = arith.mulf %127, %131 : vector<8x32xf32>
    %133 = vector.broadcast %22 : vector<1x32xf32> to vector<8x32xf32>
    %134 = arith.mulf %132, %133 : vector<8x32xf32>
    %135 = vector.broadcast %23 : vector<1x32xf32> to vector<8x32xf32>
    %136 = arith.addf %134, %135 : vector<8x32xf32>
    %cst_40 = arith.constant dense<0.000000e+00> : vector<8x128xf32>
    %137 = tpu.matmul %136, %28, %cst_40 {dimension_numbers = #tpu.dot_dimension_numbers<[1], [0], [0], [1], [0, 0, 1, 1], [], []>} : vector<8x32xf32>, vector<32x128xf32>, vector<8x128xf32> -> vector<8x128xf32>
    %138 = vector.broadcast %24 : vector<1x128xf32> to vector<8x128xf32>
    %139 = arith.addf %137, %138 : vector<8x128xf32>
    %cst_41 = arith.constant 5.000000e-01 : f32
    %140 = vector.broadcast %cst_41 : f32 to vector<8x128xf32>
    %141 = arith.mulf %140, %139 : vector<8x128xf32>
    %cst_42 = arith.constant 0.707106769 : f32
    %142 = vector.broadcast %cst_42 : f32 to vector<8x128xf32>
    %143 = arith.mulf %139, %142 : vector<8x128xf32>
    %144 = math.erf %143 : vector<8x128xf32>
    %cst_43 = arith.constant 1.000000e+00 : f32
    %145 = vector.broadcast %cst_43 : f32 to vector<8x128xf32>
    %146 = arith.addf %145, %144 : vector<8x128xf32>
    %147 = arith.mulf %141, %146 : vector<8x128xf32>
    %cst_44 = arith.constant dense<0.000000e+00> : vector<8x32xf32>
    %148 = tpu.matmul %147, %29, %cst_44 {dimension_numbers = #tpu.dot_dimension_numbers<[1], [0], [0], [1], [0, 0, 1, 1], [], []>} : vector<8x128xf32>, vector<128x32xf32>, vector<8x32xf32> -> vector<8x32xf32>
    %149 = vector.broadcast %25 : vector<1x32xf32> to vector<8x32xf32>
    %150 = arith.addf %148, %149 : vector<8x32xf32>
    %151 = arith.addf %114, %150 : vector<8x32xf32>
    %c8 = arith.constant 8 : index
    %c0_45 = arith.constant 0 : index
    %152 = vector.load %arg3[%c8, %c0_45] : memref<24x128xf32, #tpu.memory_space<vmem>>, vector<8x128xf32>
    %153 = vector.extract_strided_slice %152 {offsets = [0, 0], sizes = [1, 32], strides = [1, 1]} : vector<8x128xf32> to vector<1x32xf32>
    %154 = vector.extract_strided_slice %152 {offsets = [1, 0], sizes = [1, 32], strides = [1, 1]} : vector<8x128xf32> to vector<1x32xf32>
    %155 = vector.extract_strided_slice %152 {offsets = [2, 0], sizes = [1, 96], strides = [1, 1]} : vector<8x128xf32> to vector<1x96xf32>
    %156 = vector.extract_strided_slice %152 {offsets = [3, 0], sizes = [1, 32], strides = [1, 1]} : vector<8x128xf32> to vector<1x32xf32>
    %157 = vector.extract_strided_slice %152 {offsets = [4, 0], sizes = [1, 32], strides = [1, 1]} : vector<8x128xf32> to vector<1x32xf32>
    %158 = vector.extract_strided_slice %152 {offsets = [5, 0], sizes = [1, 32], strides = [1, 1]} : vector<8x128xf32> to vector<1x32xf32>
    %159 = vector.extract_strided_slice %152 {offsets = [6, 0], sizes = [1, 128], strides = [1, 1]} : vector<8x128xf32> to vector<1x128xf32>
    %160 = vector.extract_strided_slice %152 {offsets = [7, 0], sizes = [1, 32], strides = [1, 1]} : vector<8x128xf32> to vector<1x32xf32>
    %c320 = arith.constant 320 : index
    %c0_46 = arith.constant 0 : index
    %161 = vector.load %arg4[%c320, %c0_46] : memref<544x128xf32, #tpu.memory_space<vmem>>, vector<32x96xf32>
    %c352 = arith.constant 352 : index
    %c0_47 = arith.constant 0 : index
    %162 = vector.load %arg4[%c352, %c0_47] : memref<544x128xf32, #tpu.memory_space<vmem>>, vector<32x32xf32>
    %c384 = arith.constant 384 : index
    %c0_48 = arith.constant 0 : index
    %163 = vector.load %arg4[%c384, %c0_48] : memref<544x128xf32, #tpu.memory_space<vmem>>, vector<32x128xf32>
    %c416 = arith.constant 416 : index
    %c0_49 = arith.constant 0 : index
    %164 = vector.load %arg4[%c416, %c0_49] : memref<544x128xf32, #tpu.memory_space<vmem>>, vector<128x32xf32>
    %cst_50 = arith.constant dense<0.000000e+00> : vector<8xf32>
    %165 = vector.multi_reduction <add>, %151, %cst_50 [1] : vector<8x32xf32> to vector<8xf32>
    %166 = vector.shape_cast %165 : vector<8xf32> to vector<8x1xf32>
    %cst_51 = arith.constant 3.200000e+01 : f32
    %167 = vector.broadcast %cst_51 : f32 to vector<8x1xf32>
    %168 = arith.divf %166, %167 : vector<8x1xf32>
    %169 = vector.broadcast %168 : vector<8x1xf32> to vector<8x32xf32>
    %170 = arith.subf %151, %169 : vector<8x32xf32>
    %171 = arith.mulf %170, %170 : vector<8x32xf32>
    %cst_52 = arith.constant dense<0.000000e+00> : vector<8xf32>
    %172 = vector.multi_reduction <add>, %171, %cst_52 [1] : vector<8x32xf32> to vector<8xf32>
    %173 = vector.shape_cast %172 : vector<8xf32> to vector<8x1xf32>
    %cst_53 = arith.constant 3.200000e+01 : f32
    %174 = vector.broadcast %cst_53 : f32 to vector<8x1xf32>
    %175 = arith.divf %173, %174 : vector<8x1xf32>
    %176 = vector.broadcast %168 : vector<8x1xf32> to vector<8x32xf32>
    %177 = arith.subf %151, %176 : vector<8x32xf32>
    %cst_54 = arith.constant 9.99999974E-6 : f32
    %178 = vector.broadcast %cst_54 : f32 to vector<8x1xf32>
    %179 = arith.addf %175, %178 : vector<8x1xf32>
    %180 = math.rsqrt %179 : vector<8x1xf32>
    %181 = vector.broadcast %180 : vector<8x1xf32> to vector<8x32xf32>
    %182 = arith.mulf %177, %181 : vector<8x32xf32>
    %183 = vector.broadcast %153 : vector<1x32xf32> to vector<8x32xf32>
    %184 = arith.mulf %182, %183 : vector<8x32xf32>
    %185 = vector.broadcast %154 : vector<1x32xf32> to vector<8x32xf32>
    %186 = arith.addf %184, %185 : vector<8x32xf32>
    %cst_55 = arith.constant dense<0.000000e+00> : vector<8x96xf32>
    %187 = tpu.matmul %186, %161, %cst_55 {dimension_numbers = #tpu.dot_dimension_numbers<[1], [0], [0], [1], [0, 0, 1, 1], [], []>} : vector<8x32xf32>, vector<32x96xf32>, vector<8x96xf32> -> vector<8x96xf32>
    %188 = vector.broadcast %155 : vector<1x96xf32> to vector<8x96xf32>
    %189 = arith.addf %187, %188 : vector<8x96xf32>
    %190 = vector.extract_strided_slice %189 {offsets = [0, 0], sizes = [8, 8], strides = [1, 1]} : vector<8x96xf32> to vector<8x8xf32>
    %191 = vector.extract_strided_slice %189 {offsets = [0, 32], sizes = [8, 8], strides = [1, 1]} : vector<8x96xf32> to vector<8x8xf32>
    %cst_56 = arith.constant dense<0.000000e+00> : vector<8x8xf32>
    %192 = tpu.matmul %190, %191, %cst_56 {dimension_numbers = #tpu.dot_dimension_numbers<[1], [1], [0], [0], [0, 0, 1, 0], [], []>} : vector<8x8xf32>, vector<8x8xf32>, vector<8x8xf32> -> vector<8x8xf32>
    %193 = vector.extract_strided_slice %189 {offsets = [0, 8], sizes = [8, 8], strides = [1, 1]} : vector<8x96xf32> to vector<8x8xf32>
    %194 = vector.extract_strided_slice %189 {offsets = [0, 40], sizes = [8, 8], strides = [1, 1]} : vector<8x96xf32> to vector<8x8xf32>
    %cst_57 = arith.constant dense<0.000000e+00> : vector<8x8xf32>
    %195 = tpu.matmul %193, %194, %cst_57 {dimension_numbers = #tpu.dot_dimension_numbers<[1], [1], [0], [0], [0, 0, 1, 0], [], []>} : vector<8x8xf32>, vector<8x8xf32>, vector<8x8xf32> -> vector<8x8xf32>
    %196 = vector.extract_strided_slice %189 {offsets = [0, 16], sizes = [8, 8], strides = [1, 1]} : vector<8x96xf32> to vector<8x8xf32>
    %197 = vector.extract_strided_slice %189 {offsets = [0, 48], sizes = [8, 8], strides = [1, 1]} : vector<8x96xf32> to vector<8x8xf32>
    %cst_58 = arith.constant dense<0.000000e+00> : vector<8x8xf32>
    %198 = tpu.matmul %196, %197, %cst_58 {dimension_numbers = #tpu.dot_dimension_numbers<[1], [1], [0], [0], [0, 0, 1, 0], [], []>} : vector<8x8xf32>, vector<8x8xf32>, vector<8x8xf32> -> vector<8x8xf32>
    %199 = vector.extract_strided_slice %189 {offsets = [0, 24], sizes = [8, 8], strides = [1, 1]} : vector<8x96xf32> to vector<8x8xf32>
    %200 = vector.extract_strided_slice %189 {offsets = [0, 56], sizes = [8, 8], strides = [1, 1]} : vector<8x96xf32> to vector<8x8xf32>
    %cst_59 = arith.constant dense<0.000000e+00> : vector<8x8xf32>
    %201 = tpu.matmul %199, %200, %cst_59 {dimension_numbers = #tpu.dot_dimension_numbers<[1], [1], [0], [0], [0, 0, 1, 0], [], []>} : vector<8x8xf32>, vector<8x8xf32>, vector<8x8xf32> -> vector<8x8xf32>
    %202 = vector.shape_cast %192 : vector<8x8xf32> to vector<1x8x8xf32>
    %203 = vector.shape_cast %195 : vector<8x8xf32> to vector<1x8x8xf32>
    %204 = vector.shape_cast %198 : vector<8x8xf32> to vector<1x8x8xf32>
    %205 = vector.shape_cast %201 : vector<8x8xf32> to vector<1x8x8xf32>
    %206 = tpu.concatenate %202, %203, %204, %205 in 0 : vector<1x8x8xf32>, vector<1x8x8xf32>, vector<1x8x8xf32>, vector<1x8x8xf32> -> vector<4x8x8xf32>
    %207 = vector.shape_cast %16 : vector<8x8xf32> to vector<1x8x8xf32>
    %208 = vector.broadcast %207 : vector<1x8x8xf32> to vector<4x8x8xf32>
    %209 = arith.addf %206, %208 : vector<4x8x8xf32>
    %cst_60 = arith.constant dense<0xFF800000> : vector<4x8xf32>
    %210 = vector.multi_reduction <maximumf>, %209, %cst_60 [2] : vector<4x8x8xf32> to vector<4x8xf32>
    %211 = vector.shape_cast %210 : vector<4x8xf32> to vector<4x8x1xf32>
    %212 = vector.broadcast %211 : vector<4x8x1xf32> to vector<4x8x8xf32>
    %213 = arith.subf %209, %212 : vector<4x8x8xf32>
    %214 = math.exp %213 : vector<4x8x8xf32>
    %cst_61 = arith.constant dense<0.000000e+00> : vector<4x8xf32>
    %215 = vector.multi_reduction <add>, %214, %cst_61 [2] : vector<4x8x8xf32> to vector<4x8xf32>
    %216 = vector.shape_cast %215 : vector<4x8xf32> to vector<4x8x1xf32>
    %217 = tpu.reciprocal %216 {approx = true} : vector<4x8x1xf32> -> vector<4x8x1xf32>
    %218 = vector.broadcast %217 : vector<4x8x1xf32> to vector<4x8x8xf32>
    %219 = arith.mulf %214, %218 : vector<4x8x8xf32>
    %220 = vector.extract_strided_slice %189 {offsets = [0, 64], sizes = [8, 8], strides = [1, 1]} : vector<8x96xf32> to vector<8x8xf32>
    %221 = vector.extract_strided_slice %219 {offsets = [0, 0, 0], sizes = [1, 8, 8], strides = [1, 1, 1]} : vector<4x8x8xf32> to vector<1x8x8xf32>
    %222 = vector.shape_cast %221 : vector<1x8x8xf32> to vector<8x8xf32>
    %cst_62 = arith.constant dense<0.000000e+00> : vector<8x8xf32>
    %223 = tpu.matmul %222, %220, %cst_62 {dimension_numbers = #tpu.dot_dimension_numbers<[1], [0], [0], [1], [0, 0, 1, 1], [], []>} : vector<8x8xf32>, vector<8x8xf32>, vector<8x8xf32> -> vector<8x8xf32>
    %224 = vector.extract_strided_slice %162 {offsets = [0, 0], sizes = [8, 32], strides = [1, 1]} : vector<32x32xf32> to vector<8x32xf32>
    %cst_63 = arith.constant dense<0.000000e+00> : vector<8x32xf32>
    %225 = tpu.matmul %223, %224, %cst_63 {dimension_numbers = #tpu.dot_dimension_numbers<[1], [0], [0], [1], [0, 0, 1, 1], [], []>} : vector<8x8xf32>, vector<8x32xf32>, vector<8x32xf32> -> vector<8x32xf32>
    %226 = vector.extract_strided_slice %189 {offsets = [0, 72], sizes = [8, 8], strides = [1, 1]} : vector<8x96xf32> to vector<8x8xf32>
    %227 = vector.extract_strided_slice %219 {offsets = [1, 0, 0], sizes = [1, 8, 8], strides = [1, 1, 1]} : vector<4x8x8xf32> to vector<1x8x8xf32>
    %228 = vector.shape_cast %227 : vector<1x8x8xf32> to vector<8x8xf32>
    %cst_64 = arith.constant dense<0.000000e+00> : vector<8x8xf32>
    %229 = tpu.matmul %228, %226, %cst_64 {dimension_numbers = #tpu.dot_dimension_numbers<[1], [0], [0], [1], [0, 0, 1, 1], [], []>} : vector<8x8xf32>, vector<8x8xf32>, vector<8x8xf32> -> vector<8x8xf32>
    %230 = vector.extract_strided_slice %162 {offsets = [8, 0], sizes = [8, 32], strides = [1, 1]} : vector<32x32xf32> to vector<8x32xf32>
    %cst_65 = arith.constant dense<0.000000e+00> : vector<8x32xf32>
    %231 = tpu.matmul %229, %230, %cst_65 {dimension_numbers = #tpu.dot_dimension_numbers<[1], [0], [0], [1], [0, 0, 1, 1], [], []>} : vector<8x8xf32>, vector<8x32xf32>, vector<8x32xf32> -> vector<8x32xf32>
    %232 = arith.addf %225, %231 : vector<8x32xf32>
    %233 = vector.extract_strided_slice %189 {offsets = [0, 80], sizes = [8, 8], strides = [1, 1]} : vector<8x96xf32> to vector<8x8xf32>
    %234 = vector.extract_strided_slice %219 {offsets = [2, 0, 0], sizes = [1, 8, 8], strides = [1, 1, 1]} : vector<4x8x8xf32> to vector<1x8x8xf32>
    %235 = vector.shape_cast %234 : vector<1x8x8xf32> to vector<8x8xf32>
    %cst_66 = arith.constant dense<0.000000e+00> : vector<8x8xf32>
    %236 = tpu.matmul %235, %233, %cst_66 {dimension_numbers = #tpu.dot_dimension_numbers<[1], [0], [0], [1], [0, 0, 1, 1], [], []>} : vector<8x8xf32>, vector<8x8xf32>, vector<8x8xf32> -> vector<8x8xf32>
    %237 = vector.extract_strided_slice %162 {offsets = [16, 0], sizes = [8, 32], strides = [1, 1]} : vector<32x32xf32> to vector<8x32xf32>
    %cst_67 = arith.constant dense<0.000000e+00> : vector<8x32xf32>
    %238 = tpu.matmul %236, %237, %cst_67 {dimension_numbers = #tpu.dot_dimension_numbers<[1], [0], [0], [1], [0, 0, 1, 1], [], []>} : vector<8x8xf32>, vector<8x32xf32>, vector<8x32xf32> -> vector<8x32xf32>
    %239 = arith.addf %232, %238 : vector<8x32xf32>
    %240 = vector.extract_strided_slice %189 {offsets = [0, 88], sizes = [8, 8], strides = [1, 1]} : vector<8x96xf32> to vector<8x8xf32>
    %241 = vector.extract_strided_slice %219 {offsets = [3, 0, 0], sizes = [1, 8, 8], strides = [1, 1, 1]} : vector<4x8x8xf32> to vector<1x8x8xf32>
    %242 = vector.shape_cast %241 : vector<1x8x8xf32> to vector<8x8xf32>
    %cst_68 = arith.constant dense<0.000000e+00> : vector<8x8xf32>
    %243 = tpu.matmul %242, %240, %cst_68 {dimension_numbers = #tpu.dot_dimension_numbers<[1], [0], [0], [1], [0, 0, 1, 1], [], []>} : vector<8x8xf32>, vector<8x8xf32>, vector<8x8xf32> -> vector<8x8xf32>
    %244 = vector.extract_strided_slice %162 {offsets = [24, 0], sizes = [8, 32], strides = [1, 1]} : vector<32x32xf32> to vector<8x32xf32>
    %cst_69 = arith.constant dense<0.000000e+00> : vector<8x32xf32>
    %245 = tpu.matmul %243, %244, %cst_69 {dimension_numbers = #tpu.dot_dimension_numbers<[1], [0], [0], [1], [0, 0, 1, 1], [], []>} : vector<8x8xf32>, vector<8x32xf32>, vector<8x32xf32> -> vector<8x32xf32>
    %246 = arith.addf %239, %245 : vector<8x32xf32>
    %247 = arith.addf %151, %246 : vector<8x32xf32>
    %248 = vector.broadcast %156 : vector<1x32xf32> to vector<8x32xf32>
    %249 = arith.addf %247, %248 : vector<8x32xf32>
    %cst_70 = arith.constant dense<0.000000e+00> : vector<8xf32>
    %250 = vector.multi_reduction <add>, %249, %cst_70 [1] : vector<8x32xf32> to vector<8xf32>
    %251 = vector.shape_cast %250 : vector<8xf32> to vector<8x1xf32>
    %cst_71 = arith.constant 3.200000e+01 : f32
    %252 = vector.broadcast %cst_71 : f32 to vector<8x1xf32>
    %253 = arith.divf %251, %252 : vector<8x1xf32>
    %254 = vector.broadcast %253 : vector<8x1xf32> to vector<8x32xf32>
    %255 = arith.subf %249, %254 : vector<8x32xf32>
    %256 = arith.mulf %255, %255 : vector<8x32xf32>
    %cst_72 = arith.constant dense<0.000000e+00> : vector<8xf32>
    %257 = vector.multi_reduction <add>, %256, %cst_72 [1] : vector<8x32xf32> to vector<8xf32>
    %258 = vector.shape_cast %257 : vector<8xf32> to vector<8x1xf32>
    %cst_73 = arith.constant 3.200000e+01 : f32
    %259 = vector.broadcast %cst_73 : f32 to vector<8x1xf32>
    %260 = arith.divf %258, %259 : vector<8x1xf32>
    %261 = vector.broadcast %253 : vector<8x1xf32> to vector<8x32xf32>
    %262 = arith.subf %249, %261 : vector<8x32xf32>
    %cst_74 = arith.constant 9.99999974E-6 : f32
    %263 = vector.broadcast %cst_74 : f32 to vector<8x1xf32>
    %264 = arith.addf %260, %263 : vector<8x1xf32>
    %265 = math.rsqrt %264 : vector<8x1xf32>
    %266 = vector.broadcast %265 : vector<8x1xf32> to vector<8x32xf32>
    %267 = arith.mulf %262, %266 : vector<8x32xf32>
    %268 = vector.broadcast %157 : vector<1x32xf32> to vector<8x32xf32>
    %269 = arith.mulf %267, %268 : vector<8x32xf32>
    %270 = vector.broadcast %158 : vector<1x32xf32> to vector<8x32xf32>
    %271 = arith.addf %269, %270 : vector<8x32xf32>
    %cst_75 = arith.constant dense<0.000000e+00> : vector<8x128xf32>
    %272 = tpu.matmul %271, %163, %cst_75 {dimension_numbers = #tpu.dot_dimension_numbers<[1], [0], [0], [1], [0, 0, 1, 1], [], []>} : vector<8x32xf32>, vector<32x128xf32>, vector<8x128xf32> -> vector<8x128xf32>
    %273 = vector.broadcast %159 : vector<1x128xf32> to vector<8x128xf32>
    %274 = arith.addf %272, %273 : vector<8x128xf32>
    %cst_76 = arith.constant 5.000000e-01 : f32
    %275 = vector.broadcast %cst_76 : f32 to vector<8x128xf32>
    %276 = arith.mulf %275, %274 : vector<8x128xf32>
    %cst_77 = arith.constant 0.707106769 : f32
    %277 = vector.broadcast %cst_77 : f32 to vector<8x128xf32>
    %278 = arith.mulf %274, %277 : vector<8x128xf32>
    %279 = math.erf %278 : vector<8x128xf32>
    %cst_78 = arith.constant 1.000000e+00 : f32
    %280 = vector.broadcast %cst_78 : f32 to vector<8x128xf32>
    %281 = arith.addf %280, %279 : vector<8x128xf32>
    %282 = arith.mulf %276, %281 : vector<8x128xf32>
    %cst_79 = arith.constant dense<0.000000e+00> : vector<8x32xf32>
    %283 = tpu.matmul %282, %164, %cst_79 {dimension_numbers = #tpu.dot_dimension_numbers<[1], [0], [0], [1], [0, 0, 1, 1], [], []>} : vector<8x128xf32>, vector<128x32xf32>, vector<8x32xf32> -> vector<8x32xf32>
    %284 = vector.broadcast %160 : vector<1x32xf32> to vector<8x32xf32>
    %285 = arith.addf %283, %284 : vector<8x32xf32>
    %286 = arith.addf %249, %285 : vector<8x32xf32>
    %c16 = arith.constant 16 : index
    %c0_80 = arith.constant 0 : index
    %287 = vector.load %arg3[%c16, %c0_80] : memref<24x128xf32, #tpu.memory_space<vmem>>, vector<8x128xf32>
    %288 = vector.extract_strided_slice %287 {offsets = [0, 0], sizes = [1, 32], strides = [1, 1]} : vector<8x128xf32> to vector<1x32xf32>
    %289 = vector.extract_strided_slice %287 {offsets = [1, 0], sizes = [1, 32], strides = [1, 1]} : vector<8x128xf32> to vector<1x32xf32>
    %cst_81 = arith.constant dense<0.000000e+00> : vector<8xf32>
    %290 = vector.multi_reduction <add>, %286, %cst_81 [1] : vector<8x32xf32> to vector<8xf32>
    %291 = vector.shape_cast %290 : vector<8xf32> to vector<8x1xf32>
    %cst_82 = arith.constant 3.200000e+01 : f32
    %292 = vector.broadcast %cst_82 : f32 to vector<8x1xf32>
    %293 = arith.divf %291, %292 : vector<8x1xf32>
    %294 = vector.broadcast %293 : vector<8x1xf32> to vector<8x32xf32>
    %295 = arith.subf %286, %294 : vector<8x32xf32>
    %296 = arith.mulf %295, %295 : vector<8x32xf32>
    %cst_83 = arith.constant dense<0.000000e+00> : vector<8xf32>
    %297 = vector.multi_reduction <add>, %296, %cst_83 [1] : vector<8x32xf32> to vector<8xf32>
    %298 = vector.shape_cast %297 : vector<8xf32> to vector<8x1xf32>
    %cst_84 = arith.constant 3.200000e+01 : f32
    %299 = vector.broadcast %cst_84 : f32 to vector<8x1xf32>
    %300 = arith.divf %298, %299 : vector<8x1xf32>
    %301 = vector.broadcast %293 : vector<8x1xf32> to vector<8x32xf32>
    %302 = arith.subf %286, %301 : vector<8x32xf32>
    %cst_85 = arith.constant 9.99999974E-6 : f32
    %303 = vector.broadcast %cst_85 : f32 to vector<8x1xf32>
    %304 = arith.addf %300, %303 : vector<8x1xf32>
    %305 = math.rsqrt %304 : vector<8x1xf32>
    %306 = vector.broadcast %305 : vector<8x1xf32> to vector<8x32xf32>
    %307 = arith.mulf %302, %306 : vector<8x32xf32>
    %308 = vector.broadcast %288 : vector<1x32xf32> to vector<8x32xf32>
    %309 = arith.mulf %307, %308 : vector<8x32xf32>
    %310 = vector.broadcast %289 : vector<1x32xf32> to vector<8x32xf32>
    %311 = arith.addf %309, %310 : vector<8x32xf32>
    %c64 = arith.constant 64 : index
    %c0_86 = arith.constant 0 : index
    %312 = vector.load %arg4[%c64, %c0_86] : memref<544x128xf32, #tpu.memory_space<vmem>>, vector<32x128xf32>
    %cst_87 = arith.constant dense<0.000000e+00> : vector<8x128xf32>
    %313 = tpu.matmul %311, %312, %cst_87 {dimension_numbers = #tpu.dot_dimension_numbers<[1], [0], [0], [1], [0, 0, 1, 1], [], []>} : vector<8x32xf32>, vector<32x128xf32>, vector<8x128xf32> -> vector<8x128xf32>
    %c0_88 = arith.constant 0 : index
    %c0_89 = arith.constant 0 : index
    %314 = vector.load %arg5[%c0_88, %c0_89] : memref<8x128xf32, #tpu.memory_space<vmem>>, vector<8x128xf32>
    tpu.vector_store %arg5[%c0_88, %c0_89], %313 {strides = array<i32>} : memref<8x128xf32, #tpu.memory_space<vmem>>, vector<8x128xf32>,
    return
  }
  func.func @transform_0(%arg0: i32) -> (i32, i32) {
    %c0_i32 = arith.constant 0 : i32
    %c0_i32_0 = arith.constant 0 : i32
    return %arg0, %c0_i32 : i32, i32
  }
  func.func @transform_1(%arg0: i32) -> (i32, i32) {
    %c0_i32 = arith.constant 0 : i32
    %c0_i32_0 = arith.constant 0 : i32
    %c0_i32_1 = arith.constant 0 : i32
    return %c0_i32, %c0_i32_0 : i32, i32
  }
  func.func @transform_2(%arg0: i32) -> (i32, i32) {
    %c0_i32 = arith.constant 0 : i32
    %c0_i32_0 = arith.constant 0 : i32
    %c0_i32_1 = arith.constant 0 : i32
    return %c0_i32, %c0_i32_0 : i32, i32
  }
  func.func @transform_3(%arg0: i32) -> (i32, i32) {
    %c0_i32 = arith.constant 0 : i32
    %c0_i32_0 = arith.constant 0 : i32
    %c0_i32_1 = arith.constant 0 : i32
    return %c0_i32, %c0_i32_0 : i32, i32
  }
  func.func @transform_4(%arg0: i32) -> (i32, i32) {
    %c0_i32 = arith.constant 0 : i32
    %c0_i32_0 = arith.constant 0 : i32
    return %arg0, %c0_i32 : i32, i32
  }
}

</mosaic_0001>

<llo_original>
// kernel: gpt_forward.1
$region0: #{gpt_forward.1}
  #allocation0 [shape = 'u32[]', space=smem, size = 0x4, offset = 0x4, fixed_abs, tag = 'smem constant byte address 0x4 - core index']
  #allocation1 [shape = 'u32[72,128]{1,0:T(1,128)}', space=vmem, size = 0x9000, scoped, tag = 'internal scratch']
  %s0 = inlined_call_operand.vmem [shape: s32[16,1], index: 0, kind: input, shape index: {}]
  %s1 = inlined_call_operand.vmem [shape: f32[8,32], index: 1, kind: input, shape index: {}]
  %s2 = inlined_call_operand.vmem [shape: f32[24,128], index: 2, kind: input, shape index: {}]
  %s3 = inlined_call_operand.hbm [shape: f32[544,128], index: 3, kind: input, shape index: {}]
  %s4 = inlined_call_operand.vmem [shape: f32[16,128], index: 4, kind: output, shape index: {}]
  %s5 = sld [smem:[#allocation0]]
  $region53: #{gpt_forward.1} parent=0
    _
  %s7 = ssub.s32 1, %s5
  %s8 = scalar_select 0, %s7, %s5
  $region1: #{gpt_forward.1} parent=0
    #allocation2 [shape = 'u8[278528]{0}', space=vmem, size = 0x44000, scoped, tag = 'input window, operand 3, single buffered']
    #allocation3 [shape = 's32[2]{0}', space=sflag, size = 0x8, scoped, tag = 'scoped memory for gpt_forward.1']
    %9 = vsyncpa [#allocation3], 0
    loop: start=0, step=1, limit=4
    $region2: #{gpt_forward.1} parent=1 // loop_pre_header
      _
    $region3: #{gpt_forward.1} parent=1 // loop_header
      %s11 = sphi 0, %s15
      %p12 = scmp.ge.s32.totalorder %s11, 4
      %s21 = sphi 0, %s23
      %s24 = sphi 0, %s21
      %s25 = sphi 0, %s24
      %s41 = sphi 0, %s25
      %s45 = sphi 0, %s45
      %s47 = sphi 0, %s45
      %s48 = sphi 0, %s47
      %s62 = sphi 0, %s48
      %s66 = sphi 0, %s66
      %s68 = sphi 0, %s66
      %s69 = sphi 0, %s68
      %s83 = sphi 0, %s69
      %s87 = sphi 0, %s87
      %s89 = sphi 0, %s87
      %s90 = sphi 0, %s89
      %s104 = sphi 0, %s90
      %s110 = sphi 0, %s112
      %s113 = sphi 0, %s110
      %s114 = sphi 0, %s113
      %s130 = sphi 0, %s114
    $region4: #{gpt_forward.1} parent=1 // loop_header_branch
      %14 = sbr.rel (%p12) target = $region8
    $region5: #{gpt_forward.1} parent=1 // loop_body
      %s16 = ssub.s32 %s11, 1
      %s17 = ssub.s32 %s11, 2
      %s18 = sadd.s32 %s11, 1
      %s19 = ssub.s32 %s11, %s18
      %p20 = scmp.eq.s32.totalorder %s19, 0
      %s22 = sadd.s32 %s21, 1
      %s23 = scalar_select %p20, %s21, %s22
      %p26 = pneg %p20
      %p27 = scmp.eq.s32.totalorder %s11, 1
      %p28 = por %p26, %p27
      %p29 = scmp.ne.s32.totalorder %s21, %s24
      %p30 = scmp.eq.s32.totalorder %s11, 0
      %p31 = por %p29, %p30
      %p32 = scmp.ne.s32.totalorder %s21, %s24
      %p33 = scmp.eq.s32.totalorder %s16, 1
      %p34 = por %p32, %p33
      %p35 = scmp.ne.s32.totalorder %s24, %s25
      %p36 = scmp.eq.s32.totalorder %s16, 0
      %p37 = por %p35, %p36
      %p38 = scmp.ne.s32.totalorder %s24, %s25
      %p39 = scmp.eq.s32.totalorder %s17, 1
      %p40 = por %p38, %p39
      %p42 = scmp.ne.s32.totalorder %s25, %s41
      %p43 = scmp.eq.s32.totalorder %s17, 0
      %p44 = por %p42, %p43
      %s46 = sadd.s32 %s45, 1
      %p49 = scmp.eq.s32.totalorder %s11, 1
      %p50 = scmp.ne.s32.totalorder %s45, %s47
      %p51 = scmp.eq.s32.totalorder %s11, 0
      %p52 = por %p50, %p51
      %p53 = scmp.ne.s32.totalorder %s45, %s47
      %p54 = scmp.eq.s32.totalorder %s16, 1
      %p55 = por %p53, %p54
      %p56 = scmp.ne.s32.totalorder %s47, %s48
      %p57 = scmp.eq.s32.totalorder %s16, 0
      %p58 = por %p56, %p57
      %p59 = scmp.ne.s32.totalorder %s47, %s48
      %p60 = scmp.eq.s32.totalorder %s17, 1
      %p61 = por %p59, %p60
      %p63 = scmp.ne.s32.totalorder %s48, %s62
      %p64 = scmp.eq.s32.totalorder %s17, 0
      %p65 = por %p63, %p64
      %s67 = sadd.s32 %s66, 1
      %p70 = scmp.eq.s32.totalorder %s11, 1
      %p71 = scmp.ne.s32.totalorder %s66, %s68
      %p72 = scmp.eq.s32.totalorder %s11, 0
      %p73 = por %p71, %p72
      %p74 = scmp.ne.s32.totalorder %s66, %s68
      %p75 = scmp.eq.s32.totalorder %s16, 1
      %p76 = por %p74, %p75
      %p77 = scmp.ne.s32.totalorder %s68, %s69
      %p78 = scmp.eq.s32.totalorder %s16, 0
      %p79 = por %p77, %p78
      %p80 = scmp.ne.s32.totalorder %s68, %s69
      %p81 = scmp.eq.s32.totalorder %s17, 1
      %p82 = por %p80, %p81
      %p84 = scmp.ne.s32.totalorder %s69, %s83
      %p85 = scmp.eq.s32.totalorder %s17, 0
      %p86 = por %p84, %p85
      %s88 = sadd.s32 %s87, 1
      %p91 = scmp.eq.s32.totalorder %s11, 1
      %p92 = scmp.ne.s32.totalorder %s87, %s89
      %p93 = scmp.eq.s32.totalorder %s11, 0
      %p94 = por %p92, %p93
      %p95 = scmp.ne.s32.totalorder %s87, %s89
      %p96 = scmp.eq.s32.totalorder %s16, 1
      %p97 = por %p95, %p96
      %p98 = scmp.ne.s32.totalorder %s89, %s90
      %p99 = scmp.eq.s32.totalorder %s16, 0
      %p100 = por %p98, %p99
      %p101 = scmp.ne.s32.totalorder %s89, %s90
      %p102 = scmp.eq.s32.totalorder %s17, 1
      %p103 = por %p101, %p102
      %p105 = scmp.ne.s32.totalorder %s90, %s104
      %p106 = scmp.eq.s32.totalorder %s17, 0
      %p107 = por %p105, %p106
      %s108 = ssub.s32 %s11, %s18
      %p109 = scmp.eq.s32.totalorder %s108, 0
      %s111 = sadd.s32 %s110, 1
      %s112 = scalar_select %p109, %s110, %s111
      %p115 = pneg %p109
      %p116 = scmp.eq.s32.totalorder %s11, 1
      %p117 = por %p115, %p116
      %p118 = scmp.ne.s32.totalorder %s110, %s113
      %p119 = scmp.eq.s32.totalorder %s11, 0
      %p120 = por %p118, %p119
      %p121 = scmp.ne.s32.totalorder %s110, %s113
      %p122 = scmp.eq.s32.totalorder %s16, 1
      %p123 = por %p121, %p122
      %p124 = scmp.ne.s32.totalorder %s113, %s114
      %p125 = scmp.eq.s32.totalorder %s16, 0
      %p126 = por %p124, %p125
      %p127 = scmp.ne.s32.totalorder %s113, %s114
      %p128 = scmp.eq.s32.totalorder %s17, 1
      %p129 = por %p127, %p128
      %p131 = scmp.ne.s32.totalorder %s114, %s130
      %p132 = scmp.eq.s32.totalorder %s17, 0
      %p133 = por %p131, %p132
      %p134 = scmp.le.s32.totalorder 1, %s11
      %p135 = scmp.lt.s32.totalorder %s11, 3
      %p136 = pnand %p134, %p135
      %p137 = pneg %p136
      // Predicated region
      $region9: #{gpt_forward.1} parent=5 // pred_check
        _
      $region10: #{gpt_forward.1} parent=5 // pred_check_branch
        %139 = sbr.rel (%p136) target = $region12
      $region11: #{gpt_forward.1} parent=5 // pred_region
        %s140 = ssub.s32 %s11, 1
        // Predicated region
        $region13: #{gpt_forward.1} parent=11 // pred_check
          %p141 = pneg %p58
        $region14: #{gpt_forward.1} parent=11 // pred_check_branch
          %143 = sbr.rel (%p141) target = $region16
        $region15: #{gpt_forward.1} parent=11 // pred_region
          _
        $region16: #{gpt_forward.1} parent=11 // pred_fallthru
          _
        // Predicated region
        $region17: #{gpt_forward.1} parent=11 // pred_check
          %p144 = pneg %p79
        $region18: #{gpt_forward.1} parent=11 // pred_check_branch
          %146 = sbr.rel (%p144) target = $region20
        $region19: #{gpt_forward.1} parent=11 // pred_region
          _
        $region20: #{gpt_forward.1} parent=11 // pred_fallthru
          _
        // Predicated region
        $region21: #{gpt_forward.1} parent=11 // pred_check
          %p147 = pneg %p100
        $region22: #{gpt_forward.1} parent=11 // pred_check_branch
          %149 = sbr.rel (%p147) target = $region24
        $region23: #{gpt_forward.1} parent=11 // pred_region
          %151 = vsyncadd [#allocation3], 0
          %s152 = sshll.u32 %s3, 4
          %s153 = int_to_ptr.hbm [resolvable:$true] %s152
          %s154 = sshll.u32 [#allocation2], 4
          %s155 = int_to_ptr.vmem [resolvable:$true] %s154
          %160 = dma.hbm_to_vmem [thread:$0]  %s153, 8704, %s155, [#allocation3], 128, 128, 8
        $region24: #{gpt_forward.1} parent=11 // pred_fallthru
          _
      $region12: #{gpt_forward.1} parent=5 // pred_fallthru
        _
      %p161 = scmp.lt.s32.totalorder %s11, 2
      // Predicated region
      $region25: #{gpt_forward.1} parent=5 // pred_check
        %p162 = pneg %p161
      $region26: #{gpt_forward.1} parent=5 // pred_check_branch
        %164 = sbr.rel (%p162) target = $region28
      $region27: #{gpt_forward.1} parent=5 // pred_region
        // Predicated region
        $region29: #{gpt_forward.1} parent=27 // pred_check
          %p165 = pneg %p31
        $region30: #{gpt_forward.1} parent=27 // pred_check_branch
          %167 = sbr.rel (%p165) target = $region32
        $region31: #{gpt_forward.1} parent=27 // pred_region
          %p168 = scmp.lt.s32.totalorder %s11, 1
          %s169 = scalar_select %p168, %s11, 1
          %s170 = smul.addr %s169, 8
          %s171 = scalar_lea.vmem %s0, %s170
        $region32: #{gpt_forward.1} parent=27 // pred_fallthru
          _
      $region28: #{gpt_forward.1} parent=5 // pred_fallthru
        _
      %p172 = scmp.le.s32.totalorder 1, %s11
      %p173 = scmp.lt.s32.totalorder %s11, 3
      %p174 = pnand %p172, %p173
      %p175 = pneg %p174
      // Predicated region
      $region33: #{gpt_forward.1} parent=5 // pred_check
        _
      $region34: #{gpt_forward.1} parent=5 // pred_check_branch
        %177 = sbr.rel (%p174) target = $region36
      $region35: #{gpt_forward.1} parent=5 // pred_region
        %s178 = ssub.s32 %s11, 1
        // Predicated region
        $region37: #{gpt_forward.1} parent=35 // pred_check
          %p179 = pneg %p100
        $region38: #{gpt_forward.1} parent=35 // pred_check_branch
          %181 = sbr.rel (%p179) target = $region40
        $region39: #{gpt_forward.1} parent=35 // pred_region
          %183 = dma.done [#allocation3], 8704
        $region40: #{gpt_forward.1} parent=35 // pred_fallthru
          _
        %p184 = scmp.lt.s32.totalorder %s16, 1
        %s185 = scalar_select %p184, %s16, 1
        %s186 = smul.addr %s185, 8
        %s187 = scalar_lea.vmem %s0, %s186
        %p188 = pneg %p37
        %p189 = pneg %p34
        %p190 = pneg %p58
        %p191 = pneg %p55
        %p192 = pneg %p79
        %p193 = pneg %p76
        %p194 = pneg %p100
        %p195 = pneg %p97
        %p196 = pneg %p126
        %p197 = pneg %p123
        %p198 = scmp.lt.s32.totalorder %s16, 1
        %s199 = scalar_select %p198, %s16, 1
        %s200 = smul.addr %s199, 8
        %s201 = scalar_lea.vmem %s4, %s200
        %p202 = scmp.lt.s32.totalorder %s16, 1
        %s203 = scalar_select %p202, %s16, 1
        %s204 = smul.addr %s203, 8
        %s205 = scalar_lea.vmem %s0, %s204
        %p206 = scmp.lt.s32.totalorder %s16, 1
        %s207 = scalar_select %p206, %s16, 1
        %s208 = smul.addr %s207, 8
        %s209 = scalar_lea.vmem %s4, %s208
        %v210 = vld [vmem:[%s205] sm:$0xff]
        %v211 = vlaneseq
        %v212 = vand.u32 %v211, 127
        %213 = vset.pattern.permute.xlu0 0
        %214 = vperm.xlu0 %213, %v210
        %v215 = vpop.permute.xlu0 %214
        %vm216 = vcmp.eq.s32.totalorder %v215, %v212
        %v217 = vsel %vm216, 1.0, 0.0
        %v218 = vld [vmem:[#allocation2] sm:$0xff]
        %v219 = vld [vmem:[#allocation2 + $0x8] sm:$0xff]
        %v220 = vld [vmem:[#allocation2 + $0x10] sm:$0xff]
        %v221 = vld [vmem:[#allocation2 + $0x18] sm:$0xff]
        %v222 = vld [vmem:[#allocation2 + $0x20] sm:$0xff]
        %v223 = vld [vmem:[#allocation2 + $0x28] sm:$0xff]
        %v224 = vld [vmem:[#allocation2 + $0x30] sm:$0xff]
        %v225 = vld [vmem:[#allocation2 + $0x38] sm:$0xff]
        %v226 = vld [vmem:[%s1] sm:$0xff]
        %vm227 = vcmask 523264
        %v229 = vsel %vm227, %v217, 0
        %231 = vmatpush.msra.mxu0 0.0
        %232 = vmatpush.msra.mxu0 0.0
        %233 = vmatpush.msra.mxu0 0.0
        %234 = vmatpush.msra.mxu0 0.0
        %235 = vmatpush.msra.mxu0 0.0
        %236 = vmatpush.msra.mxu0 0.0
        %237 = vmatpush.msra.mxu0 0.0
        %238 = vmatpush.msra.mxu0 0.0
        %239 = vmatpush.msra.mxu0 %v225
        %240 = vmatpush.msra.mxu0 %v224
        %241 = vmatpush.msra.mxu0 %v223
        %242 = vmatpush.msra.mxu0 %v222
        %243 = vmatpush.msra.mxu0 %v221
        %244 = vmatpush.msra.mxu0 %v220
        %245 = vmatpush.msra.mxu0 %v219
        %246 = vmatpush.msra.mxu0 %v218
        %247 = vmatmul.f32.gmra.mxu0 %v229
        %v248 = vpop.f32.mrf.mxu0
        %v249 = vadd.f32 %v226, %v248
        %250 = vdwg.mxu0
        %v251 = vlaneseq
        %v252 = vshrl.u32 %v251, 7
        %vm253 = vcmp.le.s32.totalorder %v212, %v252
        %v254 = vsel %vm253, 0.0, -1e+30
        %v255 = vld [vmem:[%s2] sm:$0xff]
        %v256 = vld [vmem:[#allocation2 + $0x60] sm:$0xff]
        %v257 = vld [vmem:[#allocation2 + $0x68] sm:$0xff]
        %v258 = vld [vmem:[#allocation2 + $0x70] sm:$0xff]
        %v259 = vld [vmem:[#allocation2 + $0x78] sm:$0xff]
        %v260 = vld [vmem:[#allocation2 + $0x80] sm:$0xff]
        %v261 = vld [vmem:[#allocation2 + $0x88] sm:$0xff]
        %v262 = vld [vmem:[#allocation2 + $0x90] sm:$0xff]
        %v263 = vld [vmem:[#allocation2 + $0x98] sm:$0xff]
        %v264 = vld [vmem:[#allocation2 + $0xa0] sm:$0xff]
        %v265 = vld [vmem:[#allocation2 + $0xa8] sm:$0xff]
        %v266 = vld [vmem:[#allocation2 + $0xb0] sm:$0xff]
        %v267 = vld [vmem:[#allocation2 + $0xb8] sm:$0xff]
        %v268 = vld [vmem:[#allocation2 + $0xc0] sm:$0xff]
        %v269 = vld [vmem:[#allocation2 + $0xc8] sm:$0xff]
        %v270 = vld [vmem:[#allocation2 + $0xd0] sm:$0xff]
        %v271 = vld [vmem:[#allocation2 + $0xd8] sm:$0xff]
        %v272 = vld [vmem:[#allocation2 + $0xe0] sm:$0xff]
        %v273 = vld [vmem:[#allocation2 + $0xe8] sm:$0xff]
        %v274 = vld [vmem:[#allocation2 + $0xf0] sm:$0xff]
        %v275 = vld [vmem:[#allocation2 + $0xf8] sm:$0xff]
        %v276 = vld [vmem:[#allocation2 + $0x100] sm:$0xff]
        %v277 = vld [vmem:[#allocation2 + $0x108] sm:$0xff]
        %v278 = vld [vmem:[#allocation2 + $0x110] sm:$0xff]
        %v279 = vld [vmem:[#allocation2 + $0x118] sm:$0xff]
        %v280 = vld [vmem:[#allocation2 + $0x120] sm:$0xff]
        %v281 = vld [vmem:[#allocation2 + $0x128] sm:$0xff]
        %v282 = vld [vmem:[#allocation2 + $0x130] sm:$0xff]
        %v283 = vld [vmem:[#allocation2 + $0x138] sm:$0xff]
        %vm284 = vcmask 261120
        %v285 = vsel %vm284, %v249, 0.0
        %286 = vadd.xlane.f32.xlu0 %v285
        %v287 = vpop.xlane.xlu0 %286
        %v288 = vrcp.pop 32.0
        %v289 = vmul.f32 32.0, %v288
        %v290 = vsub.f32 1.0, %v289
        %v291 = vmul.f32 %v288, %v290
        %v292 = vadd.f32 %v288, %v291
        %vm293 = vweird.f32 %v288
        %v294 = vsel %vm293, %v288, %v292
        %v295 = vmul.f32 %v287, %v294
        %v296 = vsub.f32 %v249, %v295
        %v297 = vmul.f32 %v296, %v296
        %v298 = vsel %vm284, %v297, 0.0
        %299 = vadd.xlane.f32.xlu0 %v298
        %v300 = vpop.xlane.xlu0 %299
        %v301 = vmul.f32 %v300, %v294
        %v302 = vadd.f32 %v301, 1e-05
        %v303 = vrsqrt.pop %v302
        %v304 = vmul.f32 %v303, %v302
        %v305 = vmul.f32 %v304, %v303
        %v306 = vmul.f32 0.5, %v305
        %v307 = vsub.f32 1.5, %v306
        %v308 = vmul.f32 %v303, %v307
        %vm309 = vweird.f32 %v302
        %vm310 = vweird.f32 %v303
        %vm311 = vmor %vm309, %vm310
        %v312 = vsel %vm311, %v303, %v308
        %v313 = vmul.f32 %v296, %v312
        %v314 = vperm.slane %v255, 0
        %v315 = vmul.f32 %v313, %v314
        %v316 = vperm.slane %v255, 1
        %v317 = vadd.f32 %v315, %v316
        %v318 = vperm.slane %v255, 2
        %v320 = vsel %vm284, %v317, 0
        %322 = vmatpush.msra.mxu0 0.0
        %323 = vmatpush.msra.mxu0 0.0
        %324 = vmatpush.msra.mxu0 0.0
        %325 = vmatpush.msra.mxu0 0.0
        %326 = vmatpush.msra.mxu0 0.0
        %327 = vmatpush.msra.mxu0 0.0
        %328 = vmatpush.msra.mxu0 0.0
        %329 = vmatpush.msra.mxu0 0.0
        %330 = vmatpush.msra.mxu0 0.0
        %331 = vmatpush.msra.mxu0 0.0
        %332 = vmatpush.msra.mxu0 0.0
        %333 = vmatpush.msra.mxu0 0.0
        %334 = vmatpush.msra.mxu0 %v259
        %335 = vmatpush.msra.mxu0 %v258
        %336 = vmatpush.msra.mxu0 %v257
        %337 = vmatpush.msra.mxu0 %v256
        %338 = vmatmul.f32.gmra.mxu0 %v320
        %v339 = vpop.f32.mrf.mxu0
        %v340 = vadd.f32 %v318, %v339
        %341 = vdwg.mxu0
        %343 = vrot.lane.b32.xlu0 %v340, 96
        %v344 = vpop.permute.xlu0 %343
        %vm345 = vcmask 64512
        %v346 = vsel %vm345, %v340, 0
        %v348 = vsel %vm345, %v344, 0
        %350 = vmatpush.xpose.msra.mxu0 0.0
        %351 = vmatpush.xpose.msra.mxu0 0.0
        %352 = vmatpush.xpose.msra.mxu0 0.0
        %353 = vmatpush.xpose.msra.mxu0 0.0
        %354 = vmatpush.xpose.msra.mxu0 0.0
        %355 = vmatpush.xpose.msra.mxu0 0.0
        %356 = vmatpush.xpose.msra.mxu0 0.0
        %357 = vmatpush.xpose.msra.mxu0 0.0
        %358 = vmatpush.xpose.msra.mxu0 0.0
        %359 = vmatpush.xpose.msra.mxu0 0.0
        %360 = vmatpush.xpose.msra.mxu0 0.0
        %361 = vmatpush.xpose.msra.mxu0 0.0
        %362 = vmatpush.xpose.msra.mxu0 0.0
        %363 = vmatpush.xpose.msra.mxu0 0.0
        %364 = vmatpush.xpose.msra.mxu0 0.0
        %365 = vmatpush.xpose.msra.mxu0 %v348
        %366 = vmatmul.f32.gmra.mxu0 %v346
        %v367 = vpop.f32.mrf.mxu0
        %v368 = vadd.f32 0.0, %v367
        %369 = vdwg.mxu0
        %370 = vrot.lane.b32.xlu0 %v340, 120
        %v371 = vpop.permute.xlu0 %370
        %372 = vrot.lane.b32.xlu0 %v340, 88
        %v373 = vpop.permute.xlu0 %372
        %v374 = vsel %vm345, %v371, 0
        %v376 = vsel %vm345, %v373, 0
        %378 = vmatpush.xpose.msra.mxu0 0.0
        %379 = vmatpush.xpose.msra.mxu0 0.0
        %380 = vmatpush.xpose.msra.mxu0 0.0
        %381 = vmatpush.xpose.msra.mxu0 0.0
        %382 = vmatpush.xpose.msra.mxu0 0.0
        %383 = vmatpush.xpose.msra.mxu0 0.0
        %384 = vmatpush.xpose.msra.mxu0 0.0
        %385 = vmatpush.xpose.msra.mxu0 0.0
        %386 = vmatpush.xpose.msra.mxu0 0.0
        %387 = vmatpush.xpose.msra.mxu0 0.0
        %388 = vmatpush.xpose.msra.mxu0 0.0
        %389 = vmatpush.xpose.msra.mxu0 0.0
        %390 = vmatpush.xpose.msra.mxu0 0.0
        %391 = vmatpush.xpose.msra.mxu0 0.0
        %392 = vmatpush.xpose.msra.mxu0 0.0
        %393 = vmatpush.xpose.msra.mxu0 %v376
        %394 = vmatmul.f32.gmra.mxu0 %v374
        %v395 = vpop.f32.mrf.mxu0
        %v396 = vadd.f32 0.0, %v395
        %397 = vdwg.mxu0
        %398 = vrot.lane.b32.xlu0 %v340, 112
        %v399 = vpop.permute.xlu0 %398
        %400 = vrot.lane.b32.xlu0 %v340, 80
        %v401 = vpop.permute.xlu0 %400
        %v402 = vsel %vm345, %v399, 0
        %v404 = vsel %vm345, %v401, 0
        %406 = vmatpush.xpose.msra.mxu0 0.0
        %407 = vmatpush.xpose.msra.mxu0 0.0
        %408 = vmatpush.xpose.msra.mxu0 0.0
        %409 = vmatpush.xpose.msra.mxu0 0.0
        %410 = vmatpush.xpose.msra.mxu0 0.0
        %411 = vmatpush.xpose.msra.mxu0 0.0
        %412 = vmatpush.xpose.msra.mxu0 0.0
        %413 = vmatpush.xpose.msra.mxu0 0.0
        %414 = vmatpush.xpose.msra.mxu0 0.0
        %415 = vmatpush.xpose.msra.mxu0 0.0
        %416 = vmatpush.xpose.msra.mxu0 0.0
        %417 = vmatpush.xpose.msra.mxu0 0.0
        %418 = vmatpush.xpose.msra.mxu0 0.0
        %419 = vmatpush.xpose.msra.mxu0 0.0
        %420 = vmatpush.xpose.msra.mxu0 0.0
        %421 = vmatpush.xpose.msra.mxu0 %v404
        %422 = vmatmul.f32.gmra.mxu0 %v402
        %v423 = vpop.f32.mrf.mxu0
        %v424 = vadd.f32 0.0, %v423
        %425 = vdwg.mxu0
        %426 = vrot.lane.b32.xlu0 %v340, 104
        %v427 = vpop.permute.xlu0 %426
        %428 = vrot.lane.b32.xlu0 %v340, 72
        %v429 = vpop.permute.xlu0 %428
        %v430 = vsel %vm345, %v427, 0
        %v432 = vsel %vm345, %v429, 0
        %434 = vmatpush.xpose.msra.mxu0 0.0
        %435 = vmatpush.xpose.msra.mxu0 0.0
        %436 = vmatpush.xpose.msra.mxu0 0.0
        %437 = vmatpush.xpose.msra.mxu0 0.0
        %438 = vmatpush.xpose.msra.mxu0 0.0
        %439 = vmatpush.xpose.msra.mxu0 0.0
        %440 = vmatpush.xpose.msra.mxu0 0.0
        %441 = vmatpush.xpose.msra.mxu0 0.0
        %442 = vmatpush.xpose.msra.mxu0 0.0
        %443 = vmatpush.xpose.msra.mxu0 0.0
        %444 = vmatpush.xpose.msra.mxu0 0.0
        %445 = vmatpush.xpose.msra.mxu0 0.0
        %446 = vmatpush.xpose.msra.mxu0 0.0
        %447 = vmatpush.xpose.msra.mxu0 0.0
        %448 = vmatpush.xpose.msra.mxu0 0.0
        %449 = vmatpush.xpose.msra.mxu0 %v432
        %450 = vmatmul.f32.gmra.mxu0 %v430
        %v451 = vpop.f32.mrf.mxu0
        %v452 = vadd.f32 0.0, %v451
        %453 = vdwg.mxu0
        %v454 = vadd.f32 %v368, %v254
        %v455 = vadd.f32 %v396, %v254
        %v456 = vadd.f32 %v424, %v254
        %v457 = vadd.f32 %v452, %v254
        %v458 = vsel %vm345, %v454, -inf
        %459 = vmax.xlane.f32.xlu0 %v458
        %v460 = vpop.xlane.xlu0 %459
        %v461 = vsel %vm345, %v455, -inf
        %462 = vmax.xlane.f32.xlu0 %v461
        %v463 = vpop.xlane.xlu0 %462
        %v464 = vsel %vm345, %v456, -inf
        %465 = vmax.xlane.f32.xlu0 %v464
        %v466 = vpop.xlane.xlu0 %465
        %v467 = vsel %vm345, %v457, -inf
        %468 = vmax.xlane.f32.xlu0 %v467
        %v469 = vpop.xlane.xlu0 %468
        %v470 = vsub.f32 %v454, %v460
        %v471 = vsub.f32 %v455, %v463
        %v472 = vsub.f32 %v456, %v466
        %v473 = vsub.f32 %v457, %v469
        %v474 = vmul.f32 %v470, 1.442695
        %v475 = vpow.pop %v474
        %v476 = vmul.f32 %v471, 1.442695
        %v477 = vpow.pop %v476
        %v478 = vmul.f32 %v472, 1.442695
        %v479 = vpow.pop %v478
        %v480 = vmul.f32 %v473, 1.442695
        %v481 = vpow.pop %v480
        %v482 = vsel %vm345, %v475, 0.0
        %483 = vadd.xlane.f32.xlu0 %v482
        %v484 = vpop.xlane.xlu0 %483
        %v485 = vsel %vm345, %v477, 0.0
        %486 = vadd.xlane.f32.xlu0 %v485
        %v487 = vpop.xlane.xlu0 %486
        %v488 = vsel %vm345, %v479, 0.0
        %489 = vadd.xlane.f32.xlu0 %v488
        %v490 = vpop.xlane.xlu0 %489
        %v491 = vsel %vm345, %v481, 0.0
        %492 = vadd.xlane.f32.xlu0 %v491
        %v493 = vpop.xlane.xlu0 %492
        %v494 = vrcp.pop %v484
        %v495 = vrcp.pop %v487
        %v496 = vrcp.pop %v490
        %v497 = vrcp.pop %v493
        %v498 = vmul.f32 %v475, %v494
        %v499 = vmul.f32 %v477, %v495
        %v500 = vmul.f32 %v479, %v496
        %v501 = vmul.f32 %v481, %v497
        %502 = vrot.lane.b32.xlu0 %v340, 64
        %v503 = vpop.permute.xlu0 %502
        %v506 = vsel %vm345, %v498, 0
        %508 = vmatpush.msra.mxu0 0.0
        %509 = vmatpush.msra.mxu0 0.0
        %510 = vmatpush.msra.mxu0 0.0
        %511 = vmatpush.msra.mxu0 0.0
        %512 = vmatpush.msra.mxu0 0.0
        %513 = vmatpush.msra.mxu0 0.0
        %514 = vmatpush.msra.mxu0 0.0
        %515 = vmatpush.msra.mxu0 0.0
        %516 = vmatpush.msra.mxu0 0.0
        %517 = vmatpush.msra.mxu0 0.0
        %518 = vmatpush.msra.mxu0 0.0
        %519 = vmatpush.msra.mxu0 0.0
        %520 = vmatpush.msra.mxu0 0.0
        %521 = vmatpush.msra.mxu0 0.0
        %522 = vmatpush.msra.mxu0 0.0
        %523 = vmatpush.msra.mxu0 %v503
        %524 = vmatmul.f32.gmra.mxu0 %v506
        %v525 = vpop.f32.mrf.mxu0
        %v526 = vadd.f32 0.0, %v525
        %527 = vdwg.mxu0
        %528 = vrot.lane.b32.xlu0 %v340, 56
        %v529 = vpop.permute.xlu0 %528
        %v532 = vsel %vm345, %v499, 0
        %534 = vmatpush.msra.mxu0 0.0
        %535 = vmatpush.msra.mxu0 0.0
        %536 = vmatpush.msra.mxu0 0.0
        %537 = vmatpush.msra.mxu0 0.0
        %538 = vmatpush.msra.mxu0 0.0
        %539 = vmatpush.msra.mxu0 0.0
        %540 = vmatpush.msra.mxu0 0.0
        %541 = vmatpush.msra.mxu0 0.0
        %542 = vmatpush.msra.mxu0 0.0
        %543 = vmatpush.msra.mxu0 0.0
        %544 = vmatpush.msra.mxu0 0.0
        %545 = vmatpush.msra.mxu0 0.0
        %546 = vmatpush.msra.mxu0 0.0
        %547 = vmatpush.msra.mxu0 0.0
        %548 = vmatpush.msra.mxu0 0.0
        %549 = vmatpush.msra.mxu0 %v529
        %550 = vmatmul.f32.gmra.mxu0 %v532
        %v551 = vpop.f32.mrf.mxu0
        %v552 = vadd.f32 0.0, %v551
        %553 = vdwg.mxu0
        %v555 = vsel %vm345, %v552, 0
        %557 = vmatpush.msra.mxu0 0.0
        %558 = vmatpush.msra.mxu0 0.0
        %559 = vmatpush.msra.mxu0 0.0
        %560 = vmatpush.msra.mxu0 0.0
        %561 = vmatpush.msra.mxu0 0.0
        %562 = vmatpush.msra.mxu0 0.0
        %563 = vmatpush.msra.mxu0 0.0
        %564 = vmatpush.msra.mxu0 0.0
        %565 = vmatpush.msra.mxu0 0.0
        %566 = vmatpush.msra.mxu0 0.0
        %567 = vmatpush.msra.mxu0 0.0
        %568 = vmatpush.msra.mxu0 0.0
        %569 = vmatpush.msra.mxu0 0.0
        %570 = vmatpush.msra.mxu0 0.0
        %571 = vmatpush.msra.mxu0 0.0
        %572 = vmatpush.msra.mxu0 %v261
        %573 = vmatmul.f32.gmra.mxu0 %v555
        %v574 = vpop.f32.mrf.mxu0
        %v575 = vadd.f32 0.0, %v574
        %576 = vdwg.mxu0
        %v578 = vsel %vm345, %v526, 0
        %580 = vmatpush.msra.mxu0 0.0
        %581 = vmatpush.msra.mxu0 0.0
        %582 = vmatpush.msra.mxu0 0.0
        %583 = vmatpush.msra.mxu0 0.0
        %584 = vmatpush.msra.mxu0 0.0
        %585 = vmatpush.msra.mxu0 0.0
        %586 = vmatpush.msra.mxu0 0.0
        %587 = vmatpush.msra.mxu0 0.0
        %588 = vmatpush.msra.mxu0 0.0
        %589 = vmatpush.msra.mxu0 0.0
        %590 = vmatpush.msra.mxu0 0.0
        %591 = vmatpush.msra.mxu0 0.0
        %592 = vmatpush.msra.mxu0 0.0
        %593 = vmatpush.msra.mxu0 0.0
        %594 = vmatpush.msra.mxu0 0.0
        %595 = vmatpush.msra.mxu0 %v260
        %596 = vmatmul.f32.gmra.mxu0 %v578
        %v597 = vpop.f32.mrf.mxu0
        %v598 = vadd.f32 %v575, %v597
        %599 = vdwg.mxu0
        %600 = vrot.lane.b32.xlu0 %v340, 48
        %v601 = vpop.permute.xlu0 %600
        %v604 = vsel %vm345, %v500, 0
        %606 = vmatpush.msra.mxu0 0.0
        %607 = vmatpush.msra.mxu0 0.0
        %608 = vmatpush.msra.mxu0 0.0
        %609 = vmatpush.msra.mxu0 0.0
        %610 = vmatpush.msra.mxu0 0.0
        %611 = vmatpush.msra.mxu0 0.0
        %612 = vmatpush.msra.mxu0 0.0
        %613 = vmatpush.msra.mxu0 0.0
        %614 = vmatpush.msra.mxu0 0.0
        %615 = vmatpush.msra.mxu0 0.0
        %616 = vmatpush.msra.mxu0 0.0
        %617 = vmatpush.msra.mxu0 0.0
        %618 = vmatpush.msra.mxu0 0.0
        %619 = vmatpush.msra.mxu0 0.0
        %620 = vmatpush.msra.mxu0 0.0
        %621 = vmatpush.msra.mxu0 %v601
        %622 = vmatmul.f32.gmra.mxu0 %v604
        %v623 = vpop.f32.mrf.mxu0
        %v624 = vadd.f32 0.0, %v623
        %625 = vdwg.mxu0
        %v627 = vsel %vm345, %v624, 0
        %629 = vmatpush.msra.mxu0 0.0
        %630 = vmatpush.msra.mxu0 0.0
        %631 = vmatpush.msra.mxu0 0.0
        %632 = vmatpush.msra.mxu0 0.0
        %633 = vmatpush.msra.mxu0 0.0
        %634 = vmatpush.msra.mxu0 0.0
        %635 = vmatpush.msra.mxu0 0.0
        %636 = vmatpush.msra.mxu0 0.0
        %637 = vmatpush.msra.mxu0 0.0
        %638 = vmatpush.msra.mxu0 0.0
        %639 = vmatpush.msra.mxu0 0.0
        %640 = vmatpush.msra.mxu0 0.0
        %641 = vmatpush.msra.mxu0 0.0
        %642 = vmatpush.msra.mxu0 0.0
        %643 = vmatpush.msra.mxu0 0.0
        %644 = vmatpush.msra.mxu0 %v262
        %645 = vmatmul.f32.gmra.mxu0 %v627
        %v646 = vpop.f32.mrf.mxu0
        %v647 = vadd.f32 0.0, %v646
        %648 = vdwg.mxu0
        %v649 = vadd.f32 %v598, %v647
        %650 = vrot.lane.b32.xlu0 %v340, 40
        %v651 = vpop.permute.xlu0 %650
        %v654 = vsel %vm345, %v501, 0
        %656 = vmatpush.msra.mxu0 0.0
        %657 = vmatpush.msra.mxu0 0.0
        %658 = vmatpush.msra.mxu0 0.0
        %659 = vmatpush.msra.mxu0 0.0
        %660 = vmatpush.msra.mxu0 0.0
        %661 = vmatpush.msra.mxu0 0.0
        %662 = vmatpush.msra.mxu0 0.0
        %663 = vmatpush.msra.mxu0 0.0
        %664 = vmatpush.msra.mxu0 0.0
        %665 = vmatpush.msra.mxu0 0.0
        %666 = vmatpush.msra.mxu0 0.0
        %667 = vmatpush.msra.mxu0 0.0
        %668 = vmatpush.msra.mxu0 0.0
        %669 = vmatpush.msra.mxu0 0.0
        %670 = vmatpush.msra.mxu0 0.0
        %671 = vmatpush.msra.mxu0 %v651
        %672 = vmatmul.f32.gmra.mxu0 %v654
        %v673 = vpop.f32.mrf.mxu0
        %v674 = vadd.f32 0.0, %v673
        %675 = vdwg.mxu0
        %v677 = vsel %vm345, %v674, 0
        %679 = vmatpush.msra.mxu0 0.0
        %680 = vmatpush.msra.mxu0 0.0
        %681 = vmatpush.msra.mxu0 0.0
        %682 = vmatpush.msra.mxu0 0.0
        %683 = vmatpush.msra.mxu0 0.0
        %684 = vmatpush.msra.mxu0 0.0
        %685 = vmatpush.msra.mxu0 0.0
        %686 = vmatpush.msra.mxu0 0.0
        %687 = vmatpush.msra.mxu0 0.0
        %688 = vmatpush.msra.mxu0 0.0
        %689 = vmatpush.msra.mxu0 0.0
        %690 = vmatpush.msra.mxu0 0.0
        %691 = vmatpush.msra.mxu0 0.0
        %692 = vmatpush.msra.mxu0 0.0
        %693 = vmatpush.msra.mxu0 0.0
        %694 = vmatpush.msra.mxu0 %v263
        %695 = vmatmul.f32.gmra.mxu0 %v677
        %v696 = vpop.f32.mrf.mxu0
        %v697 = vadd.f32 0.0, %v696
        %698 = vdwg.mxu0
        %v699 = vadd.f32 %v649, %v697
        %v700 = vadd.f32 %v249, %v699
        %v701 = vperm.slane %v255, 3
        %v702 = vadd.f32 %v700, %v701
        %v703 = vsel %vm284, %v702, 0.0
        %704 = vadd.xlane.f32.xlu0 %v703
        %v705 = vpop.xlane.xlu0 %704
        %v706 = vmul.f32 %v705, %v294
        %v707 = vsub.f32 %v702, %v706
        %v708 = vmul.f32 %v707, %v707
        %v709 = vsel %vm284, %v708, 0.0
        %710 = vadd.xlane.f32.xlu0 %v709
        %v711 = vpop.xlane.xlu0 %710
        %v712 = vmul.f32 %v711, %v294
        %v713 = vadd.f32 %v712, 1e-05
        %v714 = vrsqrt.pop %v713
        %v715 = vmul.f32 %v714, %v713
        %v716 = vmul.f32 %v715, %v714
        %v717 = vmul.f32 0.5, %v716
        %v718 = vsub.f32 1.5, %v717
        %v719 = vmul.f32 %v714, %v718
        %vm720 = vweird.f32 %v713
        %vm721 = vweird.f32 %v714
        %vm722 = vmor %vm720, %vm721
        %v723 = vsel %vm722, %v714, %v719
        %v724 = vmul.f32 %v707, %v723
        %v725 = vperm.slane %v255, 4
        %v726 = vmul.f32 %v724, %v725
        %v727 = vperm.slane %v255, 5
        %v728 = vadd.f32 %v726, %v727
        %v729 = vperm.slane %v255, 6
        %v731 = vsel %vm284, %v728, 0
        %733 = vmatpush.msra.mxu0 0.0
        %734 = vmatpush.msra.mxu0 0.0
        %735 = vmatpush.msra.mxu0 0.0
        %736 = vmatpush.msra.mxu0 0.0
        %737 = vmatpush.msra.mxu0 0.0
        %738 = vmatpush.msra.mxu0 0.0
        %739 = vmatpush.msra.mxu0 0.0
        %740 = vmatpush.msra.mxu0 0.0
        %741 = vmatpush.msra.mxu0 0.0
        %742 = vmatpush.msra.mxu0 0.0
        %743 = vmatpush.msra.mxu0 0.0
        %744 = vmatpush.msra.mxu0 0.0
        %745 = vmatpush.msra.mxu0 %v267
        %746 = vmatpush.msra.mxu0 %v266
        %747 = vmatpush.msra.mxu0 %v265
        %748 = vmatpush.msra.mxu0 %v264
        %749 = vmatmul.f32.gmra.mxu0 %v731
        %v750 = vpop.f32.mrf.mxu0
        %v751 = vadd.f32 %v729, %v750
        %752 = vdwg.mxu0
        %v753 = vmul.f32 %v751, 0.5
        %v754 = vmul.f32 %v751, 0.70710677
        %v755 = vmul.f32 %v754, %v754
        %v756 = vmin.f32 16.0, %v755
        %v757 = vmul.f32 %v756, 2.1237322e-06
        %v758 = vadd.f32 %v757, 0.00028619796
        %v759 = vmul.f32 %v756, %v758
        %v760 = vadd.f32 %v759, 0.0036580483
        %v761 = vmul.f32 %v756, %v760
        %v762 = vadd.f32 %v761, 0.05243302
        %v763 = vmul.f32 %v756, %v762
        %v764 = vadd.f32 %v763, 0.18741608
        %v765 = vmul.f32 %v756, %v764
        %v766 = vadd.f32 %v765, 1.1283791
        %v767 = vmul.f32 %v754, %v766
        %v768 = vmul.f32 %v756, 3.8918573e-05
        %v769 = vadd.f32 %v768, 0.001143296
        %v770 = vmul.f32 %v756, %v769
        %v771 = vadd.f32 %v770, 0.014752088
        %v772 = vmul.f32 %v756, %v771
        %v773 = vadd.f32 %v772, 0.112945676
        %v774 = vmul.f32 %v756, %v773
        %v775 = vadd.f32 %v774, 0.4994258
        %v776 = vmul.f32 %v756, %v775
        %v777 = vadd.f32 %v776, 1.0
        %v778 = vrcp.pop %v777
        %v779 = vmul.f32 %v777, %v778
        %v780 = vsub.f32 1.0, %v779
        %v781 = vmul.f32 %v778, %v780
        %v782 = vadd.f32 %v778, %v781
        %vm783 = vweird.f32 %v777
        %vm784 = vweird.f32 %v778
        %vm785 = vmor %vm783, %vm784
        %v786 = vsel %vm785, %v778, %v782
        %v787 = vand.u32 2147483647, %v777
        %vm788 = vcmp.eq.f32.partialorder %v787, 8.507059e+37
        %v789 = vand.u32 %v777, 2147483648
        %v790 = vor.u32 1.1754944e-38, %v789
        %v791 = vsel %vm788, %v790, %v786
        %v792 = vmul.f32 %v767, %v791
        %v793 = vmin.f32 %v792, 1.0
        %v794 = vmax.f32 %v793, -1.0
        %v795 = vadd.f32 %v794, 1.0
        %v796 = vmul.f32 %v753, %v795
        %v797 = vperm.slane %v255, 7
        %798 = vmatpush.msra.mxu0 %v283
        %799 = vmatpush.msra.mxu0 %v282
        %800 = vmatpush.msra.mxu0 %v281
        %801 = vmatpush.msra.mxu0 %v280
        %802 = vmatpush.msra.mxu0 %v279
        %803 = vmatpush.msra.mxu0 %v278
        %804 = vmatpush.msra.mxu0 %v277
        %805 = vmatpush.msra.mxu0 %v276
        %806 = vmatpush.msra.mxu0 %v275
        %807 = vmatpush.msra.mxu0 %v274
        %808 = vmatpush.msra.mxu0 %v273
        %809 = vmatpush.msra.mxu0 %v272
        %810 = vmatpush.msra.mxu0 %v271
        %811 = vmatpush.msra.mxu0 %v270
        %812 = vmatpush.msra.mxu0 %v269
        %813 = vmatpush.msra.mxu0 %v268
        %814 = vmatmul.f32.gmra.mxu0 %v796
        %v815 = vpop.f32.mrf.mxu0
        %v816 = vadd.f32 %v797, %v815
        %817 = vdwg.mxu0
        %v818 = vadd.f32 %v702, %v816
        %v819 = vld [vmem:[%s2 + $0x8] sm:$0xff]
        %v820 = vld [vmem:[#allocation2 + $0x140] sm:$0xff]
        %v821 = vld [vmem:[#allocation2 + $0x148] sm:$0xff]
        %v822 = vld [vmem:[#allocation2 + $0x150] sm:$0xff]
        %v823 = vld [vmem:[#allocation2 + $0x158] sm:$0xff]
        %v824 = vld [vmem:[#allocation2 + $0x160] sm:$0xff]
        %v825 = vld [vmem:[#allocation2 + $0x168] sm:$0xff]
        %v826 = vld [vmem:[#allocation2 + $0x170] sm:$0xff]
        %v827 = vld [vmem:[#allocation2 + $0x178] sm:$0xff]
        %v828 = vld [vmem:[#allocation2 + $0x180] sm:$0xff]
        %v829 = vld [vmem:[#allocation2 + $0x188] sm:$0xff]
        %v830 = vld [vmem:[#allocation2 + $0x190] sm:$0xff]
        %v831 = vld [vmem:[#allocation2 + $0x198] sm:$0xff]
        %v832 = vld [vmem:[#allocation2 + $0x1a0] sm:$0xff]
        %v833 = vld [vmem:[#allocation2 + $0x1a8] sm:$0xff]
        %v834 = vld [vmem:[#allocation2 + $0x1b0] sm:$0xff]
        %v835 = vld [vmem:[#allocation2 + $0x1b8] sm:$0xff]
        %v836 = vld [vmem:[#allocation2 + $0x1c0] sm:$0xff]
        %v837 = vld [vmem:[#allocation2 + $0x1c8] sm:$0xff]
        %v838 = vld [vmem:[#allocation2 + $0x1d0] sm:$0xff]
        %v839 = vld [vmem:[#allocation2 + $0x1d8] sm:$0xff]
        %v840 = vld [vmem:[#allocation2 + $0x1e0] sm:$0xff]
        %v841 = vld [vmem:[#allocation2 + $0x1e8] sm:$0xff]
        %v842 = vld [vmem:[#allocation2 + $0x1f0] sm:$0xff]
        %v843 = vld [vmem:[#allocation2 + $0x1f8] sm:$0xff]
        %v844 = vld [vmem:[#allocation2 + $0x200] sm:$0xff]
        %v845 = vld [vmem:[#allocation2 + $0x208] sm:$0xff]
        %v846 = vld [vmem:[#allocation2 + $0x210] sm:$0xff]
        %v847 = vld [vmem:[#allocation2 + $0x218] sm:$0xff]
        %v848 = vsel %vm284, %v818, 0.0
        %849 = vadd.xlane.f32.xlu0 %v848
        %v850 = vpop.xlane.xlu0 %849
        %v851 = vmul.f32 %v850, %v294
        %v852 = vsub.f32 %v818, %v851
        %v853 = vmul.f32 %v852, %v852
        %v854 = vsel %vm284, %v853, 0.0
        %855 = vadd.xlane.f32.xlu0 %v854
        %v856 = vpop.xlane.xlu0 %855
        %v857 = vmul.f32 %v856, %v294
        %v858 = vadd.f32 %v857, 1e-05
        %v859 = vrsqrt.pop %v858
        %v860 = vmul.f32 %v859, %v858
        %v861 = vmul.f32 %v860, %v859
        %v862 = vmul.f32 0.5, %v861
        %v863 = vsub.f32 1.5, %v862
        %v864 = vmul.f32 %v859, %v863
        %vm865 = vweird.f32 %v858
        %vm866 = vweird.f32 %v859
        %vm867 = vmor %vm865, %vm866
        %v868 = vsel %vm867, %v859, %v864
        %v869 = vmul.f32 %v852, %v868
        %v870 = vperm.slane %v819, 0
        %v871 = vmul.f32 %v869, %v870
        %v872 = vperm.slane %v819, 1
        %v873 = vadd.f32 %v871, %v872
        %v874 = vperm.slane %v819, 2
        %v876 = vsel %vm284, %v873, 0
        %878 = vmatpush.msra.mxu0 0.0
        %879 = vmatpush.msra.mxu0 0.0
        %880 = vmatpush.msra.mxu0 0.0
        %881 = vmatpush.msra.mxu0 0.0
        %882 = vmatpush.msra.mxu0 0.0
        %883 = vmatpush.msra.mxu0 0.0
        %884 = vmatpush.msra.mxu0 0.0
        %885 = vmatpush.msra.mxu0 0.0
        %886 = vmatpush.msra.mxu0 0.0
        %887 = vmatpush.msra.mxu0 0.0
        %888 = vmatpush.msra.mxu0 0.0
        %889 = vmatpush.msra.mxu0 0.0
        %890 = vmatpush.msra.mxu0 %v823
        %891 = vmatpush.msra.mxu0 %v822
        %892 = vmatpush.msra.mxu0 %v821
        %893 = vmatpush.msra.mxu0 %v820
        %894 = vmatmul.f32.gmra.mxu0 %v876
        %v895 = vpop.f32.mrf.mxu0
        %v896 = vadd.f32 %v874, %v895
        %897 = vdwg.mxu0
        %899 = vrot.lane.b32.xlu0 %v896, 96
        %v900 = vpop.permute.xlu0 %899
        %v901 = vsel %vm345, %v896, 0
        %v903 = vsel %vm345, %v900, 0
        %905 = vmatpush.xpose.msra.mxu0 0.0
        %906 = vmatpush.xpose.msra.mxu0 0.0
        %907 = vmatpush.xpose.msra.mxu0 0.0
        %908 = vmatpush.xpose.msra.mxu0 0.0
        %909 = vmatpush.xpose.msra.mxu0 0.0
        %910 = vmatpush.xpose.msra.mxu0 0.0
        %911 = vmatpush.xpose.msra.mxu0 0.0
        %912 = vmatpush.xpose.msra.mxu0 0.0
        %913 = vmatpush.xpose.msra.mxu0 0.0
        %914 = vmatpush.xpose.msra.mxu0 0.0
        %915 = vmatpush.xpose.msra.mxu0 0.0
        %916 = vmatpush.xpose.msra.mxu0 0.0
        %917 = vmatpush.xpose.msra.mxu0 0.0
        %918 = vmatpush.xpose.msra.mxu0 0.0
        %919 = vmatpush.xpose.msra.mxu0 0.0
        %920 = vmatpush.xpose.msra.mxu0 %v903
        %921 = vmatmul.f32.gmra.mxu0 %v901
        %v922 = vpop.f32.mrf.mxu0
        %v923 = vadd.f32 0.0, %v922
        %924 = vdwg.mxu0
        %925 = vrot.lane.b32.xlu0 %v896, 120
        %v926 = vpop.permute.xlu0 %925
        %927 = vrot.lane.b32.xlu0 %v896, 88
        %v928 = vpop.permute.xlu0 %927
        %v929 = vsel %vm345, %v926, 0
        %v931 = vsel %vm345, %v928, 0
        %933 = vmatpush.xpose.msra.mxu0 0.0
        %934 = vmatpush.xpose.msra.mxu0 0.0
        %935 = vmatpush.xpose.msra.mxu0 0.0
        %936 = vmatpush.xpose.msra.mxu0 0.0
        %937 = vmatpush.xpose.msra.mxu0 0.0
        %938 = vmatpush.xpose.msra.mxu0 0.0
        %939 = vmatpush.xpose.msra.mxu0 0.0
        %940 = vmatpush.xpose.msra.mxu0 0.0
        %941 = vmatpush.xpose.msra.mxu0 0.0
        %942 = vmatpush.xpose.msra.mxu0 0.0
        %943 = vmatpush.xpose.msra.mxu0 0.0
        %944 = vmatpush.xpose.msra.mxu0 0.0
        %945 = vmatpush.xpose.msra.mxu0 0.0
        %946 = vmatpush.xpose.msra.mxu0 0.0
        %947 = vmatpush.xpose.msra.mxu0 0.0
        %948 = vmatpush.xpose.msra.mxu0 %v931
        %949 = vmatmul.f32.gmra.mxu0 %v929
        %v950 = vpop.f32.mrf.mxu0
        %v951 = vadd.f32 0.0, %v950
        %952 = vdwg.mxu0
        %953 = vrot.lane.b32.xlu0 %v896, 112
        %v954 = vpop.permute.xlu0 %953
        %955 = vrot.lane.b32.xlu0 %v896, 80
        %v956 = vpop.permute.xlu0 %955
        %v957 = vsel %vm345, %v954, 0
        %v959 = vsel %vm345, %v956, 0
        %961 = vmatpush.xpose.msra.mxu0 0.0
        %962 = vmatpush.xpose.msra.mxu0 0.0
        %963 = vmatpush.xpose.msra.mxu0 0.0
        %964 = vmatpush.xpose.msra.mxu0 0.0
        %965 = vmatpush.xpose.msra.mxu0 0.0
        %966 = vmatpush.xpose.msra.mxu0 0.0
        %967 = vmatpush.xpose.msra.mxu0 0.0
        %968 = vmatpush.xpose.msra.mxu0 0.0
        %969 = vmatpush.xpose.msra.mxu0 0.0
        %970 = vmatpush.xpose.msra.mxu0 0.0
        %971 = vmatpush.xpose.msra.mxu0 0.0
        %972 = vmatpush.xpose.msra.mxu0 0.0
        %973 = vmatpush.xpose.msra.mxu0 0.0
        %974 = vmatpush.xpose.msra.mxu0 0.0
        %975 = vmatpush.xpose.msra.mxu0 0.0
        %976 = vmatpush.xpose.msra.mxu0 %v959
        %977 = vmatmul.f32.gmra.mxu0 %v957
        %v978 = vpop.f32.mrf.mxu0
        %v979 = vadd.f32 0.0, %v978
        %980 = vdwg.mxu0
        %981 = vrot.lane.b32.xlu0 %v896, 104
        %v982 = vpop.permute.xlu0 %981
        %983 = vrot.lane.b32.xlu0 %v896, 72
        %v984 = vpop.permute.xlu0 %983
        %v985 = vsel %vm345, %v982, 0
        %v987 = vsel %vm345, %v984, 0
        %989 = vmatpush.xpose.msra.mxu0 0.0
        %990 = vmatpush.xpose.msra.mxu0 0.0
        %991 = vmatpush.xpose.msra.mxu0 0.0
        %992 = vmatpush.xpose.msra.mxu0 0.0
        %993 = vmatpush.xpose.msra.mxu0 0.0
        %994 = vmatpush.xpose.msra.mxu0 0.0
        %995 = vmatpush.xpose.msra.mxu0 0.0
        %996 = vmatpush.xpose.msra.mxu0 0.0
        %997 = vmatpush.xpose.msra.mxu0 0.0
        %998 = vmatpush.xpose.msra.mxu0 0.0
        %999 = vmatpush.xpose.msra.mxu0 0.0
        %1000 = vmatpush.xpose.msra.mxu0 0.0
        %1001 = vmatpush.xpose.msra.mxu0 0.0
        %1002 = vmatpush.xpose.msra.mxu0 0.0
        %1003 = vmatpush.xpose.msra.mxu0 0.0
        %1004 = vmatpush.xpose.msra.mxu0 %v987
        %1005 = vmatmul.f32.gmra.mxu0 %v985
        %v1006 = vpop.f32.mrf.mxu0
        %v1007 = vadd.f32 0.0, %v1006
        %1008 = vdwg.mxu0
        %v1009 = vadd.f32 %v923, %v254
        %v1010 = vadd.f32 %v951, %v254
        %v1011 = vadd.f32 %v979, %v254
        %v1012 = vadd.f32 %v1007, %v254
        %v1013 = vsel %vm345, %v1009, -inf
        %1014 = vmax.xlane.f32.xlu0 %v1013
        %v1015 = vpop.xlane.xlu0 %1014
        %v1016 = vsel %vm345, %v1010, -inf
        %1017 = vmax.xlane.f32.xlu0 %v1016
        %v1018 = vpop.xlane.xlu0 %1017
        %v1019 = vsel %vm345, %v1011, -inf
        %1020 = vmax.xlane.f32.xlu0 %v1019
        %v1021 = vpop.xlane.xlu0 %1020
        %v1022 = vsel %vm345, %v1012, -inf
        %1023 = vmax.xlane.f32.xlu0 %v1022
        %v1024 = vpop.xlane.xlu0 %1023
        %v1025 = vsub.f32 %v1009, %v1015
        %v1026 = vsub.f32 %v1010, %v1018
        %v1027 = vsub.f32 %v1011, %v1021
        %v1028 = vsub.f32 %v1012, %v1024
        %v1029 = vmul.f32 %v1025, 1.442695
        %v1030 = vpow.pop %v1029
        %v1031 = vmul.f32 %v1026, 1.442695
        %v1032 = vpow.pop %v1031
        %v1033 = vmul.f32 %v1027, 1.442695
        %v1034 = vpow.pop %v1033
        %v1035 = vmul.f32 %v1028, 1.442695
        %v1036 = vpow.pop %v1035
        %v1037 = vsel %vm345, %v1030, 0.0
        %1038 = vadd.xlane.f32.xlu0 %v1037
        %v1039 = vpop.xlane.xlu0 %1038
        %v1040 = vsel %vm345, %v1032, 0.0
        %1041 = vadd.xlane.f32.xlu0 %v1040
        %v1042 = vpop.xlane.xlu0 %1041
        %v1043 = vsel %vm345, %v1034, 0.0
        %1044 = vadd.xlane.f32.xlu0 %v1043
        %v1045 = vpop.xlane.xlu0 %1044
        %v1046 = vsel %vm345, %v1036, 0.0
        %1047 = vadd.xlane.f32.xlu0 %v1046
        %v1048 = vpop.xlane.xlu0 %1047
        %v1049 = vrcp.pop %v1039
        %v1050 = vrcp.pop %v1042
        %v1051 = vrcp.pop %v1045
        %v1052 = vrcp.pop %v1048
        %v1053 = vmul.f32 %v1030, %v1049
        %v1054 = vmul.f32 %v1032, %v1050
        %v1055 = vmul.f32 %v1034, %v1051
        %v1056 = vmul.f32 %v1036, %v1052
        %1057 = vrot.lane.b32.xlu0 %v896, 64
        %v1058 = vpop.permute.xlu0 %1057
        %v1061 = vsel %vm345, %v1053, 0
        %1063 = vmatpush.msra.mxu0 0.0
        %1064 = vmatpush.msra.mxu0 0.0
        %1065 = vmatpush.msra.mxu0 0.0
        %1066 = vmatpush.msra.mxu0 0.0
        %1067 = vmatpush.msra.mxu0 0.0
        %1068 = vmatpush.msra.mxu0 0.0
        %1069 = vmatpush.msra.mxu0 0.0
        %1070 = vmatpush.msra.mxu0 0.0
        %1071 = vmatpush.msra.mxu0 0.0
        %1072 = vmatpush.msra.mxu0 0.0
        %1073 = vmatpush.msra.mxu0 0.0
        %1074 = vmatpush.msra.mxu0 0.0
        %1075 = vmatpush.msra.mxu0 0.0
        %1076 = vmatpush.msra.mxu0 0.0
        %1077 = vmatpush.msra.mxu0 0.0
        %1078 = vmatpush.msra.mxu0 %v1058
        %1079 = vmatmul.f32.gmra.mxu0 %v1061
        %v1080 = vpop.f32.mrf.mxu0
        %v1081 = vadd.f32 0.0, %v1080
        %1082 = vdwg.mxu0
        %1083 = vrot.lane.b32.xlu0 %v896, 56
        %v1084 = vpop.permute.xlu0 %1083
        %v1087 = vsel %vm345, %v1054, 0
        %1089 = vmatpush.msra.mxu0 0.0
        %1090 = vmatpush.msra.mxu0 0.0
        %1091 = vmatpush.msra.mxu0 0.0
        %1092 = vmatpush.msra.mxu0 0.0
        %1093 = vmatpush.msra.mxu0 0.0
        %1094 = vmatpush.msra.mxu0 0.0
        %1095 = vmatpush.msra.mxu0 0.0
        %1096 = vmatpush.msra.mxu0 0.0
        %1097 = vmatpush.msra.mxu0 0.0
        %1098 = vmatpush.msra.mxu0 0.0
        %1099 = vmatpush.msra.mxu0 0.0
        %1100 = vmatpush.msra.mxu0 0.0
        %1101 = vmatpush.msra.mxu0 0.0
        %1102 = vmatpush.msra.mxu0 0.0
        %1103 = vmatpush.msra.mxu0 0.0
        %1104 = vmatpush.msra.mxu0 %v1084
        %1105 = vmatmul.f32.gmra.mxu0 %v1087
        %v1106 = vpop.f32.mrf.mxu0
        %v1107 = vadd.f32 0.0, %v1106
        %1108 = vdwg.mxu0
        %v1110 = vsel %vm345, %v1107, 0
        %1112 = vmatpush.msra.mxu0 0.0
        %1113 = vmatpush.msra.mxu0 0.0
        %1114 = vmatpush.msra.mxu0 0.0
        %1115 = vmatpush.msra.mxu0 0.0
        %1116 = vmatpush.msra.mxu0 0.0
        %1117 = vmatpush.msra.mxu0 0.0
        %1118 = vmatpush.msra.mxu0 0.0
        %1119 = vmatpush.msra.mxu0 0.0
        %1120 = vmatpush.msra.mxu0 0.0
        %1121 = vmatpush.msra.mxu0 0.0
        %1122 = vmatpush.msra.mxu0 0.0
        %1123 = vmatpush.msra.mxu0 0.0
        %1124 = vmatpush.msra.mxu0 0.0
        %1125 = vmatpush.msra.mxu0 0.0
        %1126 = vmatpush.msra.mxu0 0.0
        %1127 = vmatpush.msra.mxu0 %v825
        %1128 = vmatmul.f32.gmra.mxu0 %v1110
        %v1129 = vpop.f32.mrf.mxu0
        %v1130 = vadd.f32 0.0, %v1129
        %1131 = vdwg.mxu0
        %v1133 = vsel %vm345, %v1081, 0
        %1135 = vmatpush.msra.mxu0 0.0
        %1136 = vmatpush.msra.mxu0 0.0
        %1137 = vmatpush.msra.mxu0 0.0
        %1138 = vmatpush.msra.mxu0 0.0
        %1139 = vmatpush.msra.mxu0 0.0
        %1140 = vmatpush.msra.mxu0 0.0
        %1141 = vmatpush.msra.mxu0 0.0
        %1142 = vmatpush.msra.mxu0 0.0
        %1143 = vmatpush.msra.mxu0 0.0
        %1144 = vmatpush.msra.mxu0 0.0
        %1145 = vmatpush.msra.mxu0 0.0
        %1146 = vmatpush.msra.mxu0 0.0
        %1147 = vmatpush.msra.mxu0 0.0
        %1148 = vmatpush.msra.mxu0 0.0
        %1149 = vmatpush.msra.mxu0 0.0
        %1150 = vmatpush.msra.mxu0 %v824
        %1151 = vmatmul.f32.gmra.mxu0 %v1133
        %v1152 = vpop.f32.mrf.mxu0
        %v1153 = vadd.f32 %v1130, %v1152
        %1154 = vdwg.mxu0
        %1155 = vrot.lane.b32.xlu0 %v896, 48
        %v1156 = vpop.permute.xlu0 %1155
        %v1159 = vsel %vm345, %v1055, 0
        %1161 = vmatpush.msra.mxu0 0.0
        %1162 = vmatpush.msra.mxu0 0.0
        %1163 = vmatpush.msra.mxu0 0.0
        %1164 = vmatpush.msra.mxu0 0.0
        %1165 = vmatpush.msra.mxu0 0.0
        %1166 = vmatpush.msra.mxu0 0.0
        %1167 = vmatpush.msra.mxu0 0.0
        %1168 = vmatpush.msra.mxu0 0.0
        %1169 = vmatpush.msra.mxu0 0.0
        %1170 = vmatpush.msra.mxu0 0.0
        %1171 = vmatpush.msra.mxu0 0.0
        %1172 = vmatpush.msra.mxu0 0.0
        %1173 = vmatpush.msra.mxu0 0.0
        %1174 = vmatpush.msra.mxu0 0.0
        %1175 = vmatpush.msra.mxu0 0.0
        %1176 = vmatpush.msra.mxu0 %v1156
        %1177 = vmatmul.f32.gmra.mxu0 %v1159
        %v1178 = vpop.f32.mrf.mxu0
        %v1179 = vadd.f32 0.0, %v1178
        %1180 = vdwg.mxu0
        %v1182 = vsel %vm345, %v1179, 0
        %1184 = vmatpush.msra.mxu0 0.0
        %1185 = vmatpush.msra.mxu0 0.0
        %1186 = vmatpush.msra.mxu0 0.0
        %1187 = vmatpush.msra.mxu0 0.0
        %1188 = vmatpush.msra.mxu0 0.0
        %1189 = vmatpush.msra.mxu0 0.0
        %1190 = vmatpush.msra.mxu0 0.0
        %1191 = vmatpush.msra.mxu0 0.0
        %1192 = vmatpush.msra.mxu0 0.0
        %1193 = vmatpush.msra.mxu0 0.0
        %1194 = vmatpush.msra.mxu0 0.0
        %1195 = vmatpush.msra.mxu0 0.0
        %1196 = vmatpush.msra.mxu0 0.0
        %1197 = vmatpush.msra.mxu0 0.0
        %1198 = vmatpush.msra.mxu0 0.0
        %1199 = vmatpush.msra.mxu0 %v826
        %1200 = vmatmul.f32.gmra.mxu0 %v1182
        %v1201 = vpop.f32.mrf.mxu0
        %v1202 = vadd.f32 0.0, %v1201
        %1203 = vdwg.mxu0
        %v1204 = vadd.f32 %v1153, %v1202
        %1205 = vrot.lane.b32.xlu0 %v896, 40
        %v1206 = vpop.permute.xlu0 %1205
        %v1209 = vsel %vm345, %v1056, 0
        %1211 = vmatpush.msra.mxu0 0.0
        %1212 = vmatpush.msra.mxu0 0.0
        %1213 = vmatpush.msra.mxu0 0.0
        %1214 = vmatpush.msra.mxu0 0.0
        %1215 = vmatpush.msra.mxu0 0.0
        %1216 = vmatpush.msra.mxu0 0.0
        %1217 = vmatpush.msra.mxu0 0.0
        %1218 = vmatpush.msra.mxu0 0.0
        %1219 = vmatpush.msra.mxu0 0.0
        %1220 = vmatpush.msra.mxu0 0.0
        %1221 = vmatpush.msra.mxu0 0.0
        %1222 = vmatpush.msra.mxu0 0.0
        %1223 = vmatpush.msra.mxu0 0.0
        %1224 = vmatpush.msra.mxu0 0.0
        %1225 = vmatpush.msra.mxu0 0.0
        %1226 = vmatpush.msra.mxu0 %v1206
        %1227 = vmatmul.f32.gmra.mxu0 %v1209
        %v1228 = vpop.f32.mrf.mxu0
        %v1229 = vadd.f32 0.0, %v1228
        %1230 = vdwg.mxu0
        %v1232 = vsel %vm345, %v1229, 0
        %1234 = vmatpush.msra.mxu0 0.0
        %1235 = vmatpush.msra.mxu0 0.0
        %1236 = vmatpush.msra.mxu0 0.0
        %1237 = vmatpush.msra.mxu0 0.0
        %1238 = vmatpush.msra.mxu0 0.0
        %1239 = vmatpush.msra.mxu0 0.0
        %1240 = vmatpush.msra.mxu0 0.0
        %1241 = vmatpush.msra.mxu0 0.0
        %1242 = vmatpush.msra.mxu0 0.0
        %1243 = vmatpush.msra.mxu0 0.0
        %1244 = vmatpush.msra.mxu0 0.0
        %1245 = vmatpush.msra.mxu0 0.0
        %1246 = vmatpush.msra.mxu0 0.0
        %1247 = vmatpush.msra.mxu0 0.0
        %1248 = vmatpush.msra.mxu0 0.0
        %1249 = vmatpush.msra.mxu0 %v827
        %1250 = vmatmul.f32.gmra.mxu0 %v1232
        %v1251 = vpop.f32.mrf.mxu0
        %v1252 = vadd.f32 0.0, %v1251
        %1253 = vdwg.mxu0
        %v1254 = vadd.f32 %v1204, %v1252
        %v1255 = vadd.f32 %v818, %v1254
        %v1256 = vperm.slane %v819, 3
        %v1257 = vadd.f32 %v1255, %v1256
        %v1258 = vsel %vm284, %v1257, 0.0
        %1259 = vadd.xlane.f32.xlu0 %v1258
        %v1260 = vpop.xlane.xlu0 %1259
        %v1261 = vmul.f32 %v1260, %v294
        %v1262 = vsub.f32 %v1257, %v1261
        %v1263 = vmul.f32 %v1262, %v1262
        %v1264 = vsel %vm284, %v1263, 0.0
        %1265 = vadd.xlane.f32.xlu0 %v1264
        %v1266 = vpop.xlane.xlu0 %1265
        %v1267 = vmul.f32 %v1266, %v294
        %v1268 = vadd.f32 %v1267, 1e-05
        %v1269 = vrsqrt.pop %v1268
        %v1270 = vmul.f32 %v1269, %v1268
        %v1271 = vmul.f32 %v1270, %v1269
        %v1272 = vmul.f32 0.5, %v1271
        %v1273 = vsub.f32 1.5, %v1272
        %v1274 = vmul.f32 %v1269, %v1273
        %vm1275 = vweird.f32 %v1268
        %vm1276 = vweird.f32 %v1269
        %vm1277 = vmor %vm1275, %vm1276
        %v1278 = vsel %vm1277, %v1269, %v1274
        %v1279 = vmul.f32 %v1262, %v1278
        %v1280 = vperm.slane %v819, 4
        %v1281 = vmul.f32 %v1279, %v1280
        %v1282 = vperm.slane %v819, 5
        %v1283 = vadd.f32 %v1281, %v1282
        %v1284 = vperm.slane %v819, 6
        %v1286 = vsel %vm284, %v1283, 0
        %1288 = vmatpush.msra.mxu0 0.0
        %1289 = vmatpush.msra.mxu0 0.0
        %1290 = vmatpush.msra.mxu0 0.0
        %1291 = vmatpush.msra.mxu0 0.0
        %1292 = vmatpush.msra.mxu0 0.0
        %1293 = vmatpush.msra.mxu0 0.0
        %1294 = vmatpush.msra.mxu0 0.0
        %1295 = vmatpush.msra.mxu0 0.0
        %1296 = vmatpush.msra.mxu0 0.0
        %1297 = vmatpush.msra.mxu0 0.0
        %1298 = vmatpush.msra.mxu0 0.0
        %1299 = vmatpush.msra.mxu0 0.0
        %1300 = vmatpush.msra.mxu0 %v831
        %1301 = vmatpush.msra.mxu0 %v830
        %1302 = vmatpush.msra.mxu0 %v829
        %1303 = vmatpush.msra.mxu0 %v828
        %1304 = vmatmul.f32.gmra.mxu0 %v1286
        %v1305 = vpop.f32.mrf.mxu0
        %v1306 = vadd.f32 %v1284, %v1305
        %1307 = vdwg.mxu0
        %v1308 = vmul.f32 %v1306, 0.5
        %v1309 = vmul.f32 %v1306, 0.70710677
        %v1310 = vmul.f32 %v1309, %v1309
        %v1311 = vmin.f32 16.0, %v1310
        %v1312 = vmul.f32 %v1311, 2.1237322e-06
        %v1313 = vadd.f32 %v1312, 0.00028619796
        %v1314 = vmul.f32 %v1311, %v1313
        %v1315 = vadd.f32 %v1314, 0.0036580483
        %v1316 = vmul.f32 %v1311, %v1315
        %v1317 = vadd.f32 %v1316, 0.05243302
        %v1318 = vmul.f32 %v1311, %v1317
        %v1319 = vadd.f32 %v1318, 0.18741608
        %v1320 = vmul.f32 %v1311, %v1319
        %v1321 = vadd.f32 %v1320, 1.1283791
        %v1322 = vmul.f32 %v1309, %v1321
        %v1323 = vmul.f32 %v1311, 3.8918573e-05
        %v1324 = vadd.f32 %v1323, 0.001143296
        %v1325 = vmul.f32 %v1311, %v1324
        %v1326 = vadd.f32 %v1325, 0.014752088
        %v1327 = vmul.f32 %v1311, %v1326
        %v1328 = vadd.f32 %v1327, 0.112945676
        %v1329 = vmul.f32 %v1311, %v1328
        %v1330 = vadd.f32 %v1329, 0.4994258
        %v1331 = vmul.f32 %v1311, %v1330
        %v1332 = vadd.f32 %v1331, 1.0
        %v1333 = vrcp.pop %v1332
        %v1334 = vmul.f32 %v1332, %v1333
        %v1335 = vsub.f32 1.0, %v1334
        %v1336 = vmul.f32 %v1333, %v1335
        %v1337 = vadd.f32 %v1333, %v1336
        %vm1338 = vweird.f32 %v1332
        %vm1339 = vweird.f32 %v1333
        %vm1340 = vmor %vm1338, %vm1339
        %v1341 = vsel %vm1340, %v1333, %v1337
        %v1342 = vand.u32 2147483647, %v1332
        %vm1343 = vcmp.eq.f32.partialorder %v1342, 8.507059e+37
        %v1344 = vand.u32 %v1332, 2147483648
        %v1345 = vor.u32 1.1754944e-38, %v1344
        %v1346 = vsel %vm1343, %v1345, %v1341
        %v1347 = vmul.f32 %v1322, %v1346
        %v1348 = vmin.f32 %v1347, 1.0
        %v1349 = vmax.f32 %v1348, -1.0
        %v1350 = vadd.f32 %v1349, 1.0
        %v1351 = vmul.f32 %v1308, %v1350
        %v1352 = vperm.slane %v819, 7
        %1353 = vmatpush.msra.mxu0 %v847
        %1354 = vmatpush.msra.mxu0 %v846
        %1355 = vmatpush.msra.mxu0 %v845
        %1356 = vmatpush.msra.mxu0 %v844
        %1357 = vmatpush.msra.mxu0 %v843
        %1358 = vmatpush.msra.mxu0 %v842
        %1359 = vmatpush.msra.mxu0 %v841
        %1360 = vmatpush.msra.mxu0 %v840
        %1361 = vmatpush.msra.mxu0 %v839
        %1362 = vmatpush.msra.mxu0 %v838
        %1363 = vmatpush.msra.mxu0 %v837
        %1364 = vmatpush.msra.mxu0 %v836
        %1365 = vmatpush.msra.mxu0 %v835
        %1366 = vmatpush.msra.mxu0 %v834
        %1367 = vmatpush.msra.mxu0 %v833
        %1368 = vmatpush.msra.mxu0 %v832
        %1369 = vmatmul.f32.gmra.mxu0 %v1351
        %v1370 = vpop.f32.mrf.mxu0
        %v1371 = vadd.f32 %v1352, %v1370
        %1372 = vdwg.mxu0
        %v1373 = vadd.f32 %v1257, %v1371
        %v1374 = vld [vmem:[%s2 + $0x10] sm:$0xff]
        %v1375 = vsel %vm284, %v1373, 0.0
        %1376 = vadd.xlane.f32.xlu0 %v1375
        %v1377 = vpop.xlane.xlu0 %1376
        %v1378 = vmul.f32 %v1377, %v294
        %v1379 = vsub.f32 %v1373, %v1378
        %v1380 = vmul.f32 %v1379, %v1379
        %v1381 = vsel %vm284, %v1380, 0.0
        %1382 = vadd.xlane.f32.xlu0 %v1381
        %v1383 = vpop.xlane.xlu0 %1382
        %v1384 = vmul.f32 %v1383, %v294
        %v1385 = vadd.f32 %v1384, 1e-05
        %v1386 = vrsqrt.pop %v1385
        %v1387 = vmul.f32 %v1386, %v1385
        %v1388 = vmul.f32 %v1387, %v1386
        %v1389 = vmul.f32 0.5, %v1388
        %v1390 = vsub.f32 1.5, %v1389
        %v1391 = vmul.f32 %v1386, %v1390
        %vm1392 = vweird.f32 %v1385
        %vm1393 = vweird.f32 %v1386
        %vm1394 = vmor %vm1392, %vm1393
        %v1395 = vsel %vm1394, %v1386, %v1391
        %v1396 = vmul.f32 %v1379, %v1395
        %v1397 = vperm.slane %v1374, 0
        %v1398 = vmul.f32 %v1396, %v1397
        %v1399 = vperm.slane %v1374, 1
        %v1400 = vadd.f32 %v1398, %v1399
        %v1401 = vld [vmem:[#allocation2 + $0x40] sm:$0xff]
        %v1402 = vld [vmem:[#allocation2 + $0x48] sm:$0xff]
        %v1403 = vld [vmem:[#allocation2 + $0x50] sm:$0xff]
        %v1404 = vld [vmem:[#allocation2 + $0x58] sm:$0xff]
        %v1406 = vsel %vm284, %v1400, 0
        %1408 = vmatpush.msra.mxu0 0.0
        %1409 = vmatpush.msra.mxu0 0.0
        %1410 = vmatpush.msra.mxu0 0.0
        %1411 = vmatpush.msra.mxu0 0.0
        %1412 = vmatpush.msra.mxu0 0.0
        %1413 = vmatpush.msra.mxu0 0.0
        %1414 = vmatpush.msra.mxu0 0.0
        %1415 = vmatpush.msra.mxu0 0.0
        %1416 = vmatpush.msra.mxu0 0.0
        %1417 = vmatpush.msra.mxu0 0.0
        %1418 = vmatpush.msra.mxu0 0.0
        %1419 = vmatpush.msra.mxu0 0.0
        %1420 = vmatpush.msra.mxu0 %v1404
        %1421 = vmatpush.msra.mxu0 %v1403
        %1422 = vmatpush.msra.mxu0 %v1402
        %1423 = vmatpush.msra.mxu0 %v1401
        %1424 = vmatmul.f32.gmra.mxu0 %v1406
        %v1425 = vpop.f32.mrf.mxu0
        %v1426 = vadd.f32 0.0, %v1425
        %1427 = vdwg.mxu0
        %1428 = vst [vmem:[%s209] sm:$0xff] %v1426
        %p1429 = scmp.lt.s32.totalorder %s16, 1
        %s1430 = scalar_select %p1429, %s16, 1
        %s1431 = smul.addr %s1430, 8
        %s1432 = scalar_lea.vmem %s4, %s1431
        // Predicated region
        $region41: #{gpt_forward.1} parent=35 // pred_check
          %p1433 = pneg %p123
        $region42: #{gpt_forward.1} parent=35 // pred_check_branch
          %1435 = sbr.rel (%p1433) target = $region44
        $region43: #{gpt_forward.1} parent=35 // pred_region
          _
        $region44: #{gpt_forward.1} parent=35 // pred_fallthru
          _
      $region36: #{gpt_forward.1} parent=5 // pred_fallthru
        _
      %p1436 = scmp.le.s32.totalorder 2, %s11
      // Predicated region
      $region45: #{gpt_forward.1} parent=5 // pred_check
        %p1437 = pneg %p1436
      $region46: #{gpt_forward.1} parent=5 // pred_check_branch
        %1439 = sbr.rel (%p1437) target = $region48
      $region47: #{gpt_forward.1} parent=5 // pred_region
        %s1440 = ssub.s32 %s11, 2
        // Predicated region
        $region49: #{gpt_forward.1} parent=47 // pred_check
          %p1441 = pneg %p129
        $region50: #{gpt_forward.1} parent=47 // pred_check_branch
          %1443 = sbr.rel (%p1441) target = $region52
        $region51: #{gpt_forward.1} parent=47 // pred_region
          %p1444 = scmp.lt.s32.totalorder %s17, 1
          %s1445 = scalar_select %p1444, %s17, 1
          %s1446 = smul.addr %s1445, 8
          %s1447 = scalar_lea.vmem %s4, %s1446
        $region52: #{gpt_forward.1} parent=47 // pred_fallthru
          _
      $region48: #{gpt_forward.1} parent=5 // pred_fallthru
        _
    $region6: #{gpt_forward.1} parent=1 // loop_footer
      %s15 = sadd.s32 1, %s11
    $region7: #{gpt_forward.1} parent=1 // loop_footer_branch
      %10 = sbr.rel target = $region3
    $region8: #{gpt_forward.1} parent=1 // loop_exit
      _
    %1448 = vsyncpa [#allocation3], 1
    %s1449 = scalar_lea.sflag [#allocation3], 1
    %1450 = vsyncpa %s1449, 1

</llo_original>
